<compile_context>
chip_gen: v5e
topology: v5e:2x2
jax: 0.10.0
libtpu: 0.0.40
codegen_flags: <defaults>
</compile_context>

<pallas_src>
import functools
import numpy as np
import jax
import jax.numpy as jnp
from jax import lax
from jax.experimental import pallas as pl
from jax.experimental.pallas import tpu as pltpu


# ----------------------------------------------------------------------------- kernel

def fused_mha_kernel(q_ref, k_ref, v_ref,
                     lng_ref, lnb_ref,
                     wqT_ref, wkT_ref, wvT_ref,
                     fc1T_ref, fc2T_ref,
                     dyn_ref, stat_ref, attn_ref,
                     *, n_head, d_k, d_v, temperature, use_diag_mask, mm_dtype):
    """Whole MultiHeadAttention forward for one block of Bt batch elements."""
    Bt, Lq, D = q_ref.shape
    _, Lk, _ = k_ref.shape
    _, Lv, _ = v_ref.shape
    d_model = fc1T_ref.shape[1]

    lng = lng_ref[...]                                     # (3, D)
    lnb = lnb_ref[...]                                     # (3, D)

    def layer_norm(x2d, idx):                              # x2d: (rows, D), f32
        mean = jnp.mean(x2d, axis=-1, keepdims=True)
        var = jnp.mean((x2d - mean) ** 2, axis=-1, keepdims=True)  # biased (torch LN)
        xn = (x2d - mean) * lax.rsqrt(var + 1e-5)
        return xn * lng[idx:idx + 1, :] + lnb[idx:idx + 1, :]

    # fold batch into the sublane (M) axis: (Bt, L, D) -> (Bt*L, D)
    qn = layer_norm(q_ref[...].reshape(Bt * Lq, D), 0).astype(mm_dtype)
    kn = layer_norm(k_ref[...].reshape(Bt * Lk, D), 1).astype(mm_dtype)
    vn = layer_norm(v_ref[...].reshape(Bt * Lv, D), 2).astype(mm_dtype)

    # projections on the folded slab (heads packed along the lane axis)
    qp = jnp.dot(qn, wqT_ref[...], preferred_element_type=jnp.float32)   # (Bt*Lq, H*dk)
    kp = jnp.dot(kn, wkT_ref[...], preferred_element_type=jnp.float32)   # (Bt*Lk, H*dk)
    vp = jnp.dot(vn, wvT_ref[...], preferred_element_type=jnp.float32)   # (Bt*Lv, H*dv)

    # static branch: from_heads(to_heads(vp)) == vp, so fc2 applies directly
    stat = jnp.dot(vp.astype(mm_dtype), fc2T_ref[...],
                   preferred_element_type=jnp.float32)                   # (Bt*Lv, d_model)
    stat_ref[...] = stat.reshape(Bt, Lq, d_model)

    qp3 = qp.reshape(Bt, Lq, n_head * d_k)
    kp3 = kp.reshape(Bt, Lk, n_head * d_k)
    vp3 = vp.reshape(Bt, Lv, n_head * d_v)

    inv_temp = 1.0 / temperature
    if use_diag_mask:
        row = lax.broadcasted_iota(jnp.int32, (Bt, Lq, Lk), 1)
        col = lax.broadcasted_iota(jnp.int32, (Bt, Lq, Lk), 2)
        off_diag = row != col

    dyn_acc = jnp.zeros((Bt * Lq, d_model), jnp.float32)
    probs = []
    for h in range(n_head):                                # static unroll, n_head is small
        qh = qp3[:, :, h * d_k:(h + 1) * d_k]              # (Bt, Lq, dk)
        kh = kp3[:, :, h * d_k:(h + 1) * d_k]              # (Bt, Lk, dk)
        vh = vp3[:, :, h * d_v:(h + 1) * d_v]              # (Bt, Lv, dv)

        s = jnp.einsum("bqd,bkd->bqk", qh.astype(mm_dtype), kh.astype(mm_dtype),
                       preferred_element_type=jnp.float32) * inv_temp
        s = s - jnp.max(s, axis=-1, keepdims=True)
        e = jnp.exp(s)
        p = e / jnp.sum(e, axis=-1, keepdims=True)         # exact softmax (no approx recip)
        if use_diag_mask:
            p = jnp.where(off_diag, p, 0.0)                # mask AFTER softmax (torch ref)
        probs.append(p.reshape(Bt * Lq, Lk))

        o = jnp.einsum("bqk,bkd->bqd", p.astype(mm_dtype), vh.astype(mm_dtype),
                       preferred_element_type=jnp.float32)  # (Bt, Lq, dv)
        # fold the head-concat into the fc1 contraction: dyn += o_h @ fc1T[h]
        dyn_acc = dyn_acc + jnp.dot(o.reshape(Bt * Lq, d_v).astype(mm_dtype),
                                    fc1T_ref[h * d_v:(h + 1) * d_v, :],
                                    preferred_element_type=jnp.float32)

    dyn_ref[...] = dyn_acc.reshape(Bt, Lq, d_model)
    # heads packed along the lane axis -> one lane-dense store per grid step
    attn_ref[...] = jnp.concatenate(probs, axis=-1).reshape(Bt, Lq, n_head * Lk)


# ----------------------------------------------------------------------------- wrapper

def _pick_batch_tile(sz_b, len_q, target_rows=256, max_rows=2048):
    """Largest divisor of sz_b whose folded row count (Bt*len_q) stays within
    `max_rows`, stopping once ~MXU-row `target_rows` is reached.
    (On v7x one may additionally prefer Bt such that sz_b//Bt is even so the
    'parallel' batch axis splits across both TensorCores.)"""
    best = 1
    for bt in range(1, sz_b + 1):
        if sz_b % bt:
            continue
        if bt * len_q <= max_rows:
            best = bt
        if best * len_q >= target_rows:
            break
    return best


def multi_head_attention(q, k, v, params, *, n_head, d_k, d_v,
                         diag_mask_flag="True", matmul_dtype=jnp.float32,
                         batch_tile=None):
    """Pallas forward matching MultiHeadAttention.forward with mask=None, dropout=None."""
    sz_b, len_q, D = q.shape
    _, len_k, _ = k.shape
    _, len_v, _ = v.shape
    if len_k != len_v:
        raise ValueError(f"len_k ({len_k}) must equal len_v ({len_v})")
    if len_q != len_v:
        raise ValueError(f"len_q ({len_q}) must equal len_v ({len_v}) (static branch)")
    d_model = params["fc1_w"].shape[0]
    temperature = float(np.power(d_k, 0.5))

    if batch_tile is None:
        batch_tile = _pick_batch_tile(sz_b, len_q)
    if sz_b % batch_tile:
        raise ValueError("batch_tile must divide sz_b")
    grid_b = sz_b // batch_tile

    # stack the three LayerNorm parameter sets so they ride in on one tiny block
    ln_g = jnp.stack([params["ln1_g"], params["ln2_g"], params["ln3_g"]], 0).astype(jnp.float32)
    ln_b = jnp.stack([params["ln1_b"], params["ln2_b"], params["ln3_b"]], 0).astype(jnp.float32)

    # pre-transpose + pre-cast weights (bf16 on v6e/v7x halves weight DMA bytes)
    wqT = params["w_qs"].T.astype(matmul_dtype)
    wkT = params["w_ks"].T.astype(matmul_dtype)
    wvT = params["w_vs"].T.astype(matmul_dtype)
    fc1T = params["fc1_w"].T.astype(matmul_dtype)
    fc2T = params["fc2_w"].T.astype(matmul_dtype)

    kernel = functools.partial(
        fused_mha_kernel, n_head=n_head, d_k=d_k, d_v=d_v,
        temperature=temperature, use_diag_mask=(diag_mask_flag == "True"),
        mm_dtype=matmul_dtype)

    dyn, stat, attn_packed = pl.pallas_call(
        kernel,
        out_shape=(
            jax.ShapeDtypeStruct((sz_b, len_q, d_model), jnp.float32),
            jax.ShapeDtypeStruct((sz_b, len_q, d_model), jnp.float32),
            jax.ShapeDtypeStruct((sz_b, len_q, n_head * len_k), jnp.float32),
        ),
        grid=(grid_b,),
        in_specs=[
            pl.BlockSpec((batch_tile, len_q, D), lambda b: (b, 0, 0)),
            pl.BlockSpec((batch_tile, len_k, D), lambda b: (b, 0, 0)),
            pl.BlockSpec((batch_tile, len_v, D), lambda b: (b, 0, 0)),
            pl.BlockSpec((3, D), lambda b: (0, 0)),
            pl.BlockSpec((3, D), lambda b: (0, 0)),
            pl.BlockSpec((D, n_head * d_k), lambda b: (0, 0)),
            pl.BlockSpec((D, n_head * d_k), lambda b: (0, 0)),
            pl.BlockSpec((D, n_head * d_v), lambda b: (0, 0)),
            pl.BlockSpec((n_head * d_v, d_model), lambda b: (0, 0)),
            pl.BlockSpec((n_head * d_v, d_model), lambda b: (0, 0)),
        ],
        out_specs=(
            pl.BlockSpec((batch_tile, len_q, d_model), lambda b: (b, 0, 0)),
            pl.BlockSpec((batch_tile, len_q, d_model), lambda b: (b, 0, 0)),
            pl.BlockSpec((batch_tile, len_q, n_head * len_k), lambda b: (b, 0, 0)),
        ),
        compiler_params=pltpu.CompilerParams(dimension_semantics=("parallel",)),
    )(q.astype(jnp.float32), k.astype(jnp.float32), v.astype(jnp.float32),
      ln_g, ln_b, wqT, wkT, wvT, fc1T, fc2T)

    # (B, Lq, H*Lk) -> torch head-major (H*B, Lq, Lk): free XLA layout op
    attn = attn_packed.reshape(sz_b, len_q, n_head, len_k)
    attn = jnp.transpose(attn, (2, 0, 1, 3)).reshape(n_head * sz_b, len_q, len_k)
    return dyn, stat, attn


# ----------------------------------------------------------------------------- reference (pure JAX, for a sanity check)

def multi_head_attention_ref(q, k, v, params, *, n_head, d_k, d_v, diag_mask_flag="True"):
    hi = lax.Precision.HIGHEST

    def ln(x, g, b):
        m = jnp.mean(x, -1, keepdims=True)
        var = jnp.mean((x - m) ** 2, -1, keepdims=True)
        return (x - m) / jnp.sqrt(var + 1e-5) * g + b

    sz_b, L, _ = q.shape
    qp = jnp.dot(ln(q, params["ln1_g"], params["ln1_b"]), params["w_qs"].T, precision=hi)
    kp = jnp.dot(ln(k, params["ln2_g"], params["ln2_b"]), params["w_ks"].T, precision=hi)
    vp = jnp.dot(ln(v, params["ln3_g"], params["ln3_b"]), params["w_vs"].T, precision=hi)

    def heads(x, d):
        x = x.reshape(sz_b, L, n_head, d)
        return jnp.transpose(x, (2, 0, 1, 3)).reshape(n_head * sz_b, L, d)

    qh, kh, vh = heads(qp, d_k), heads(kp, d_k), heads(vp, d_v)
    s = jnp.einsum("nqd,nkd->nqk", qh, kh, precision=hi) / np.sqrt(d_k)
    p = jax.nn.softmax(s, axis=-1)
    if diag_mask_flag == "True":
        p = p * (1.0 - jnp.eye(L, dtype=jnp.float32))
    o = jnp.einsum("nqk,nkd->nqd", p, vh, precision=hi)

    def unheads(x):
        x = x.reshape(n_head, sz_b, L, d_v)
        return jnp.transpose(x, (1, 2, 0, 3)).reshape(sz_b, L, n_head * d_v)

    dyn = jnp.dot(unheads(o), params["fc1_w"].T, precision=hi)
    stat = jnp.dot(unheads(vh), params["fc2_w"].T, precision=hi)
    return dyn, stat, p


# ----------------------------------------------------------------------------- params + main

def init_params(key, *, n_head, d_model, d_k, d_v, input_dim):
    k1, k2, k3, k4, k5 = jax.random.split(key, 5)
    std_qk = np.sqrt(2.0 / (d_model + d_k))
    std_v = np.sqrt(2.0 / (d_model + d_v))
    return {
        # torch nn.Linear weights are (out, in)
        "w_qs": (jax.random.normal(k1, (n_head * d_k, input_dim)) * std_qk).astype(jnp.float32),
        "w_ks": (jax.random.normal(k2, (n_head * d_k, input_dim)) * std_qk).astype(jnp.float32),
        "w_vs": (jax.random.normal(k3, (n_head * d_v, input_dim)) * std_v).astype(jnp.float32),
        # LayerNorm default init (weight=1, bias=0)
        "ln1_g": jnp.ones((input_dim,), jnp.float32), "ln1_b": jnp.zeros((input_dim,), jnp.float32),
        "ln2_g": jnp.ones((input_dim,), jnp.float32), "ln2_b": jnp.zeros((input_dim,), jnp.float32),
        "ln3_g": jnp.ones((input_dim,), jnp.float32), "ln3_b": jnp.zeros((input_dim,), jnp.float32),
        # FeedForward 1x1 conv weights (out_channels, in_channels)
        "fc1_w": (jax.random.normal(k4, (d_model, n_head * d_v)) * 0.1).astype(jnp.float32),
        "fc2_w": (jax.random.normal(k5, (d_model, n_head * d_v)) * 0.1).astype(jnp.float32),
    }


if __name__ == "__main__":
    n_head, d_model, d_k, d_v = 4, 32, 8, 8
    input_dim = 32
    sz_b, seq = 2, 8

    key = jax.random.PRNGKey(0)
    kq, kk, kv, kp = jax.random.split(key, 4)
    q = jax.random.normal(kq, (sz_b, seq, input_dim), jnp.float32)
    k = jax.random.normal(kk, (sz_b, seq, input_dim), jnp.float32)
    v = jax.random.normal(kv, (sz_b, seq, input_dim), jnp.float32)
    params = init_params(kp, n_head=n_head, d_model=d_model, d_k=d_k, d_v=d_v,
                         input_dim=input_dim)

    ref_dyn, ref_stat, ref_attn = multi_head_attention_ref(
        q, k, v, params, n_head=n_head, d_k=d_k, d_v=d_v, diag_mask_flag="True")

    # f32 MXU-operand path (strict parity; the right default on v5e)
    fwd_f32 = jax.jit(functools.partial(multi_head_attention,
                                        n_head=n_head, d_k=d_k, d_v=d_v,
                                        diag_mask_flag="True",
                                        matmul_dtype=jnp.float32))
    dynamic, static, attn = fwd_f32(q, k, v, params)
    jax.block_until_ready((dynamic, static, attn))

    assert dynamic.shape == (sz_b, seq, d_model)
    assert static.shape == (sz_b, seq, d_model)
    assert attn.shape == (n_head * sz_b, seq, seq)
    assert bool(jnp.all(jnp.isfinite(dynamic))) and bool(jnp.all(jnp.isfinite(static)))

    np.testing.assert_allclose(np.asarray(dynamic), np.asarray(ref_dyn), rtol=1e-2, atol=2e-3)
    np.testing.assert_allclose(np.asarray(static), np.asarray(ref_stat), rtol=1e-2, atol=2e-3)
    np.testing.assert_allclose(np.asarray(attn), np.asarray(ref_attn), rtol=1e-2, atol=2e-3)

    # bf16 MXU-operand path (v6e/v7x: 2x MXU throughput, halved weight DMA bytes)
    fwd_bf16 = jax.jit(functools.partial(multi_head_attention,
                                         n_head=n_head, d_k=d_k, d_v=d_v,
                                         diag_mask_flag="True",
                                         matmul_dtype=jnp.bfloat16))
    dyn_bf16, stat_bf16, attn_bf16 = jax.block_until_ready(fwd_bf16(q, k, v, params))
    np.testing.assert_allclose(np.asarray(dyn_bf16), np.asarray(ref_dyn), rtol=6e-2, atol=6e-2)
    np.testing.assert_allclose(np.asarray(stat_bf16), np.asarray(ref_stat), rtol=6e-2, atol=6e-2)
    np.testing.assert_allclose(np.asarray(attn_bf16), np.asarray(ref_attn), rtol=6e-2, atol=6e-2)

    print("KERNEL_OK")
</pallas_src>

<mosaic_0001>
module attributes {stable_mosaic.version = 11 : i64} {
  func.func @fused_mha_kernel(%arg0: i32, %arg1: memref<2x8x32xf32, #tpu.memory_space<vmem>>, %arg2: memref<2x8x32xf32, #tpu.memory_space<vmem>>, %arg3: memref<2x8x32xf32, #tpu.memory_space<vmem>>, %arg4: memref<3x32xf32, #tpu.memory_space<vmem>>, %arg5: memref<3x32xf32, #tpu.memory_space<vmem>>, %arg6: memref<32x32xf32, #tpu.memory_space<vmem>>, %arg7: memref<32x32xf32, #tpu.memory_space<vmem>>, %arg8: memref<32x32xf32, #tpu.memory_space<vmem>>, %arg9: memref<32x32xf32, #tpu.memory_space<vmem>>, %arg10: memref<32x32xf32, #tpu.memory_space<vmem>>, %arg11: memref<2x8x32xf32, #tpu.memory_space<vmem>>, %arg12: memref<2x8x32xf32, #tpu.memory_space<vmem>>, %arg13: memref<2x8x32xf32, #tpu.memory_space<vmem>>) attributes {dimension_semantics = [#tpu.dimension_semantics<parallel>], iteration_bounds = array<i64: 1>, scalar_prefetch = 0 : i64, scratch_operands = 0 : i64, tpu.core_type = #tpu.core_type<tc>, window_params = [{transform_indices = @transform_0, window_bounds = array<i64: 2, 8, 32>}, {transform_indices = @transform_1, window_bounds = array<i64: 2, 8, 32>}, {transform_indices = @transform_2, window_bounds = array<i64: 2, 8, 32>}, {pipeline_mode = #tpu.pipeline_mode<synchronous>, transform_indices = @transform_3, window_bounds = array<i64: 3, 32>}, {pipeline_mode = #tpu.pipeline_mode<synchronous>, transform_indices = @transform_4, window_bounds = array<i64: 3, 32>}, {pipeline_mode = #tpu.pipeline_mode<synchronous>, transform_indices = @transform_5, window_bounds = array<i64: 32, 32>}, {pipeline_mode = #tpu.pipeline_mode<synchronous>, transform_indices = @transform_6, window_bounds = array<i64: 32, 32>}, {pipeline_mode = #tpu.pipeline_mode<synchronous>, transform_indices = @transform_7, window_bounds = array<i64: 32, 32>}, {pipeline_mode = #tpu.pipeline_mode<synchronous>, transform_indices = @transform_8, window_bounds = array<i64: 32, 32>}, {pipeline_mode = #tpu.pipeline_mode<synchronous>, transform_indices = @transform_9, window_bounds = array<i64: 32, 32>}, {transform_indices = @transform_10, window_bounds = array<i64: 2, 8, 32>}, {transform_indices = @transform_11, window_bounds = array<i64: 2, 8, 32>}, {transform_indices = @transform_12, window_bounds = array<i64: 2, 8, 32>}]} {
    %c0 = arith.constant 0 : index
    %c0_0 = arith.constant 0 : index
    %0 = vector.load %arg4[%c0, %c0_0] : memref<3x32xf32, #tpu.memory_space<vmem>>, vector<3x32xf32>
    %c0_1 = arith.constant 0 : index
    %c0_2 = arith.constant 0 : index
    %1 = vector.load %arg5[%c0_1, %c0_2] : memref<3x32xf32, #tpu.memory_space<vmem>>, vector<3x32xf32>
    %c0_3 = arith.constant 0 : index
    %c0_4 = arith.constant 0 : index
    %c0_5 = arith.constant 0 : index
    %2 = vector.load %arg1[%c0_3, %c0_4, %c0_5] : memref<2x8x32xf32, #tpu.memory_space<vmem>>, vector<2x8x32xf32>
    %3 = vector.shape_cast %2 : vector<2x8x32xf32> to vector<16x32xf32>
    %cst = arith.constant dense<0.000000e+00> : vector<16xf32>
    %4 = vector.multi_reduction <add>, %3, %cst [1] : vector<16x32xf32> to vector<16xf32>
    %5 = vector.shape_cast %4 : vector<16xf32> to vector<16x1xf32>
    %cst_6 = arith.constant 3.200000e+01 : f32
    %6 = vector.broadcast %cst_6 : f32 to vector<16x1xf32>
    %7 = arith.divf %5, %6 : vector<16x1xf32>
    %8 = vector.broadcast %7 : vector<16x1xf32> to vector<16x32xf32>
    %9 = arith.subf %3, %8 : vector<16x32xf32>
    %10 = arith.mulf %9, %9 : vector<16x32xf32>
    %cst_7 = arith.constant dense<0.000000e+00> : vector<16xf32>
    %11 = vector.multi_reduction <add>, %10, %cst_7 [1] : vector<16x32xf32> to vector<16xf32>
    %12 = vector.shape_cast %11 : vector<16xf32> to vector<16x1xf32>
    %cst_8 = arith.constant 3.200000e+01 : f32
    %13 = vector.broadcast %cst_8 : f32 to vector<16x1xf32>
    %14 = arith.divf %12, %13 : vector<16x1xf32>
    %15 = vector.broadcast %7 : vector<16x1xf32> to vector<16x32xf32>
    %16 = arith.subf %3, %15 : vector<16x32xf32>
    %cst_9 = arith.constant 9.99999974E-6 : f32
    %17 = vector.broadcast %cst_9 : f32 to vector<16x1xf32>
    %18 = arith.addf %14, %17 : vector<16x1xf32>
    %19 = math.rsqrt %18 : vector<16x1xf32>
    %20 = vector.broadcast %19 : vector<16x1xf32> to vector<16x32xf32>
    %21 = arith.mulf %16, %20 : vector<16x32xf32>
    %22 = vector.extract_strided_slice %0 {offsets = [0, 0], sizes = [1, 32], strides = [1, 1]} : vector<3x32xf32> to vector<1x32xf32>
    %23 = vector.broadcast %22 : vector<1x32xf32> to vector<16x32xf32>
    %24 = arith.mulf %21, %23 : vector<16x32xf32>
    %25 = vector.extract_strided_slice %1 {offsets = [0, 0], sizes = [1, 32], strides = [1, 1]} : vector<3x32xf32> to vector<1x32xf32>
    %26 = vector.broadcast %25 : vector<1x32xf32> to vector<16x32xf32>
    %27 = arith.addf %24, %26 : vector<16x32xf32>
    %c0_10 = arith.constant 0 : index
    %c0_11 = arith.constant 0 : index
    %c0_12 = arith.constant 0 : index
    %28 = vector.load %arg2[%c0_10, %c0_11, %c0_12] : memref<2x8x32xf32, #tpu.memory_space<vmem>>, vector<2x8x32xf32>
    %29 = vector.shape_cast %28 : vector<2x8x32xf32> to vector<16x32xf32>
    %cst_13 = arith.constant dense<0.000000e+00> : vector<16xf32>
    %30 = vector.multi_reduction <add>, %29, %cst_13 [1] : vector<16x32xf32> to vector<16xf32>
    %31 = vector.shape_cast %30 : vector<16xf32> to vector<16x1xf32>
    %cst_14 = arith.constant 3.200000e+01 : f32
    %32 = vector.broadcast %cst_14 : f32 to vector<16x1xf32>
    %33 = arith.divf %31, %32 : vector<16x1xf32>
    %34 = vector.broadcast %33 : vector<16x1xf32> to vector<16x32xf32>
    %35 = arith.subf %29, %34 : vector<16x32xf32>
    %36 = arith.mulf %35, %35 : vector<16x32xf32>
    %cst_15 = arith.constant dense<0.000000e+00> : vector<16xf32>
    %37 = vector.multi_reduction <add>, %36, %cst_15 [1] : vector<16x32xf32> to vector<16xf32>
    %38 = vector.shape_cast %37 : vector<16xf32> to vector<16x1xf32>
    %cst_16 = arith.constant 3.200000e+01 : f32
    %39 = vector.broadcast %cst_16 : f32 to vector<16x1xf32>
    %40 = arith.divf %38, %39 : vector<16x1xf32>
    %41 = vector.broadcast %33 : vector<16x1xf32> to vector<16x32xf32>
    %42 = arith.subf %29, %41 : vector<16x32xf32>
    %cst_17 = arith.constant 9.99999974E-6 : f32
    %43 = vector.broadcast %cst_17 : f32 to vector<16x1xf32>
    %44 = arith.addf %40, %43 : vector<16x1xf32>
    %45 = math.rsqrt %44 : vector<16x1xf32>
    %46 = vector.broadcast %45 : vector<16x1xf32> to vector<16x32xf32>
    %47 = arith.mulf %42, %46 : vector<16x32xf32>
    %48 = vector.extract_strided_slice %0 {offsets = [1, 0], sizes = [1, 32], strides = [1, 1]} : vector<3x32xf32> to vector<1x32xf32>
    %49 = vector.broadcast %48 : vector<1x32xf32> to vector<16x32xf32>
    %50 = arith.mulf %47, %49 : vector<16x32xf32>
    %51 = vector.extract_strided_slice %1 {offsets = [1, 0], sizes = [1, 32], strides = [1, 1]} : vector<3x32xf32> to vector<1x32xf32>
    %52 = vector.broadcast %51 : vector<1x32xf32> to vector<16x32xf32>
    %53 = arith.addf %50, %52 : vector<16x32xf32>
    %c0_18 = arith.constant 0 : index
    %c0_19 = arith.constant 0 : index
    %c0_20 = arith.constant 0 : index
    %54 = vector.load %arg3[%c0_18, %c0_19, %c0_20] : memref<2x8x32xf32, #tpu.memory_space<vmem>>, vector<2x8x32xf32>
    %55 = vector.shape_cast %54 : vector<2x8x32xf32> to vector<16x32xf32>
    %cst_21 = arith.constant dense<0.000000e+00> : vector<16xf32>
    %56 = vector.multi_reduction <add>, %55, %cst_21 [1] : vector<16x32xf32> to vector<16xf32>
    %57 = vector.shape_cast %56 : vector<16xf32> to vector<16x1xf32>
    %cst_22 = arith.constant 3.200000e+01 : f32
    %58 = vector.broadcast %cst_22 : f32 to vector<16x1xf32>
    %59 = arith.divf %57, %58 : vector<16x1xf32>
    %60 = vector.broadcast %59 : vector<16x1xf32> to vector<16x32xf32>
    %61 = arith.subf %55, %60 : vector<16x32xf32>
    %62 = arith.mulf %61, %61 : vector<16x32xf32>
    %cst_23 = arith.constant dense<0.000000e+00> : vector<16xf32>
    %63 = vector.multi_reduction <add>, %62, %cst_23 [1] : vector<16x32xf32> to vector<16xf32>
    %64 = vector.shape_cast %63 : vector<16xf32> to vector<16x1xf32>
    %cst_24 = arith.constant 3.200000e+01 : f32
    %65 = vector.broadcast %cst_24 : f32 to vector<16x1xf32>
    %66 = arith.divf %64, %65 : vector<16x1xf32>
    %67 = vector.broadcast %59 : vector<16x1xf32> to vector<16x32xf32>
    %68 = arith.subf %55, %67 : vector<16x32xf32>
    %cst_25 = arith.constant 9.99999974E-6 : f32
    %69 = vector.broadcast %cst_25 : f32 to vector<16x1xf32>
    %70 = arith.addf %66, %69 : vector<16x1xf32>
    %71 = math.rsqrt %70 : vector<16x1xf32>
    %72 = vector.broadcast %71 : vector<16x1xf32> to vector<16x32xf32>
    %73 = arith.mulf %68, %72 : vector<16x32xf32>
    %74 = vector.extract_strided_slice %0 {offsets = [2, 0], sizes = [1, 32], strides = [1, 1]} : vector<3x32xf32> to vector<1x32xf32>
    %75 = vector.broadcast %74 : vector<1x32xf32> to vector<16x32xf32>
    %76 = arith.mulf %73, %75 : vector<16x32xf32>
    %77 = vector.extract_strided_slice %1 {offsets = [2, 0], sizes = [1, 32], strides = [1, 1]} : vector<3x32xf32> to vector<1x32xf32>
    %78 = vector.broadcast %77 : vector<1x32xf32> to vector<16x32xf32>
    %79 = arith.addf %76, %78 : vector<16x32xf32>
    %c0_26 = arith.constant 0 : index
    %c0_27 = arith.constant 0 : index
    %80 = vector.load %arg6[%c0_26, %c0_27] : memref<32x32xf32, #tpu.memory_space<vmem>>, vector<32x32xf32>
    %cst_28 = arith.constant dense<0.000000e+00> : vector<16x32xf32>
    %81 = tpu.matmul %27, %80, %cst_28 {dimension_numbers = #tpu.dot_dimension_numbers<[1], [0], [0], [1], [0, 0, 1, 1], [], []>} : vector<16x32xf32>, vector<32x32xf32>, vector<16x32xf32> -> vector<16x32xf32>
    %c0_29 = arith.constant 0 : index
    %c0_30 = arith.constant 0 : index
    %82 = vector.load %arg7[%c0_29, %c0_30] : memref<32x32xf32, #tpu.memory_space<vmem>>, vector<32x32xf32>
    %cst_31 = arith.constant dense<0.000000e+00> : vector<16x32xf32>
    %83 = tpu.matmul %53, %82, %cst_31 {dimension_numbers = #tpu.dot_dimension_numbers<[1], [0], [0], [1], [0, 0, 1, 1], [], []>} : vector<16x32xf32>, vector<32x32xf32>, vector<16x32xf32> -> vector<16x32xf32>
    %c0_32 = arith.constant 0 : index
    %c0_33 = arith.constant 0 : index
    %84 = vector.load %arg8[%c0_32, %c0_33] : memref<32x32xf32, #tpu.memory_space<vmem>>, vector<32x32xf32>
    %cst_34 = arith.constant dense<0.000000e+00> : vector<16x32xf32>
    %85 = tpu.matmul %79, %84, %cst_34 {dimension_numbers = #tpu.dot_dimension_numbers<[1], [0], [0], [1], [0, 0, 1, 1], [], []>} : vector<16x32xf32>, vector<32x32xf32>, vector<16x32xf32> -> vector<16x32xf32>
    %c0_35 = arith.constant 0 : index
    %c0_36 = arith.constant 0 : index
    %86 = vector.load %arg10[%c0_35, %c0_36] : memref<32x32xf32, #tpu.memory_space<vmem>>, vector<32x32xf32>
    %cst_37 = arith.constant dense<0.000000e+00> : vector<16x32xf32>
    %87 = tpu.matmul %85, %86, %cst_37 {dimension_numbers = #tpu.dot_dimension_numbers<[1], [0], [0], [1], [0, 0, 1, 1], [], []>} : vector<16x32xf32>, vector<32x32xf32>, vector<16x32xf32> -> vector<16x32xf32>
    %88 = vector.shape_cast %87 : vector<16x32xf32> to vector<2x8x32xf32>
    %c0_38 = arith.constant 0 : index
    %c0_39 = arith.constant 0 : index
    %c0_40 = arith.constant 0 : index
    %89 = vector.load %arg12[%c0_38, %c0_39, %c0_40] : memref<2x8x32xf32, #tpu.memory_space<vmem>>, vector<2x8x32xf32>
    tpu.vector_store %arg12[%c0_38, %c0_39, %c0_40], %88 {strides = array<i32>} : memref<2x8x32xf32, #tpu.memory_space<vmem>>, vector<2x8x32xf32>,
    %90 = vector.shape_cast %81 : vector<16x32xf32> to vector<2x8x32xf32>
    %91 = vector.shape_cast %83 : vector<16x32xf32> to vector<2x8x32xf32>
    %92 = vector.shape_cast %85 : vector<16x32xf32> to vector<2x8x32xf32>
    %93 = tpu.iota {dimensions = array<i32: 1>} : vector<2x8x8xi32>
    %94 = tpu.iota {dimensions = array<i32: 2>} : vector<2x8x8xi32>
    %95 = arith.cmpi ne, %93, %94 : vector<2x8x8xi32>
    %cst_41 = arith.constant 0.000000e+00 : f32
    %96 = vector.broadcast %cst_41 : f32 to vector<16x32xf32>
    %97 = vector.extract_strided_slice %90 {offsets = [0, 0, 0], sizes = [2, 8, 8], strides = [1, 1, 1]} : vector<2x8x32xf32> to vector<2x8x8xf32>
    %98 = vector.extract_strided_slice %91 {offsets = [0, 0, 0], sizes = [2, 8, 8], strides = [1, 1, 1]} : vector<2x8x32xf32> to vector<2x8x8xf32>
    %99 = vector.extract_strided_slice %92 {offsets = [0, 0, 0], sizes = [2, 8, 8], strides = [1, 1, 1]} : vector<2x8x32xf32> to vector<2x8x8xf32>
    "tpu.trace_start"() <{level = 10 : i32, message = "bqd,bkd->bqk"}> : () -> ()
    %cst_42 = arith.constant dense<0.000000e+00> : vector<2x8x8xf32>
    %100 = tpu.matmul %97, %98, %cst_42 {dimension_numbers = #tpu.dot_dimension_numbers<[2], [2], [1], [1], [0, 0, 0, 1, 1, 1], [0], [0]>} : vector<2x8x8xf32>, vector<2x8x8xf32>, vector<2x8x8xf32> -> vector<2x8x8xf32>
    "tpu.trace_stop"() : () -> ()
    %cst_43 = arith.constant 0.353553385 : f32
    %101 = vector.broadcast %cst_43 : f32 to vector<2x8x8xf32>
    %102 = arith.mulf %100, %101 : vector<2x8x8xf32>
    %cst_44 = arith.constant dense<0xFF800000> : vector<2x8xf32>
    %103 = vector.multi_reduction <maximumf>, %102, %cst_44 [2] : vector<2x8x8xf32> to vector<2x8xf32>
    %104 = vector.shape_cast %103 : vector<2x8xf32> to vector<2x8x1xf32>
    %105 = vector.broadcast %104 : vector<2x8x1xf32> to vector<2x8x8xf32>
    %106 = arith.subf %102, %105 : vector<2x8x8xf32>
    %107 = math.exp %106 : vector<2x8x8xf32>
    %cst_45 = arith.constant dense<0.000000e+00> : vector<2x8xf32>
    %108 = vector.multi_reduction <add>, %107, %cst_45 [2] : vector<2x8x8xf32> to vector<2x8xf32>
    %109 = vector.shape_cast %108 : vector<2x8xf32> to vector<2x8x1xf32>
    %110 = vector.broadcast %109 : vector<2x8x1xf32> to vector<2x8x8xf32>
    %111 = arith.divf %107, %110 : vector<2x8x8xf32>
    %cst_46 = arith.constant 0.000000e+00 : f32
    %112 = vector.broadcast %cst_46 : f32 to vector<2x8x8xf32>
    %113 = arith.select %95, %111, %112 : vector<2x8x8xi1>, vector<2x8x8xf32>
    %114 = vector.shape_cast %113 : vector<2x8x8xf32> to vector<16x8xf32>
    "tpu.trace_start"() <{level = 10 : i32, message = "bqk,bkd->bqd"}> : () -> ()
    %cst_47 = arith.constant dense<0.000000e+00> : vector<2x8x8xf32>
    %115 = tpu.matmul %113, %99, %cst_47 {dimension_numbers = #tpu.dot_dimension_numbers<[2], [1], [1], [2], [0, 0, 0, 1, 1, 2], [0], [0]>} : vector<2x8x8xf32>, vector<2x8x8xf32>, vector<2x8x8xf32> -> vector<2x8x8xf32>
    "tpu.trace_stop"() : () -> ()
    %116 = vector.shape_cast %115 : vector<2x8x8xf32> to vector<16x8xf32>
    %c0_48 = arith.constant 0 : index
    %c0_49 = arith.constant 0 : index
    %117 = vector.load %arg9[%c0_48, %c0_49] : memref<32x32xf32, #tpu.memory_space<vmem>>, vector<8x32xf32>
    %cst_50 = arith.constant dense<0.000000e+00> : vector<16x32xf32>
    %118 = tpu.matmul %116, %117, %cst_50 {dimension_numbers = #tpu.dot_dimension_numbers<[1], [0], [0], [1], [0, 0, 1, 1], [], []>} : vector<16x8xf32>, vector<8x32xf32>, vector<16x32xf32> -> vector<16x32xf32>
    %119 = arith.addf %96, %118 : vector<16x32xf32>
    %120 = vector.extract_strided_slice %90 {offsets = [0, 0, 8], sizes = [2, 8, 8], strides = [1, 1, 1]} : vector<2x8x32xf32> to vector<2x8x8xf32>
    %121 = vector.extract_strided_slice %91 {offsets = [0, 0, 8], sizes = [2, 8, 8], strides = [1, 1, 1]} : vector<2x8x32xf32> to vector<2x8x8xf32>
    %122 = vector.extract_strided_slice %92 {offsets = [0, 0, 8], sizes = [2, 8, 8], strides = [1, 1, 1]} : vector<2x8x32xf32> to vector<2x8x8xf32>
    "tpu.trace_start"() <{level = 10 : i32, message = "bqd,bkd->bqk"}> : () -> ()
    %cst_51 = arith.constant dense<0.000000e+00> : vector<2x8x8xf32>
    %123 = tpu.matmul %120, %121, %cst_51 {dimension_numbers = #tpu.dot_dimension_numbers<[2], [2], [1], [1], [0, 0, 0, 1, 1, 1], [0], [0]>} : vector<2x8x8xf32>, vector<2x8x8xf32>, vector<2x8x8xf32> -> vector<2x8x8xf32>
    "tpu.trace_stop"() : () -> ()
    %cst_52 = arith.constant 0.353553385 : f32
    %124 = vector.broadcast %cst_52 : f32 to vector<2x8x8xf32>
    %125 = arith.mulf %123, %124 : vector<2x8x8xf32>
    %cst_53 = arith.constant dense<0xFF800000> : vector<2x8xf32>
    %126 = vector.multi_reduction <maximumf>, %125, %cst_53 [2] : vector<2x8x8xf32> to vector<2x8xf32>
    %127 = vector.shape_cast %126 : vector<2x8xf32> to vector<2x8x1xf32>
    %128 = vector.broadcast %127 : vector<2x8x1xf32> to vector<2x8x8xf32>
    %129 = arith.subf %125, %128 : vector<2x8x8xf32>
    %130 = math.exp %129 : vector<2x8x8xf32>
    %cst_54 = arith.constant dense<0.000000e+00> : vector<2x8xf32>
    %131 = vector.multi_reduction <add>, %130, %cst_54 [2] : vector<2x8x8xf32> to vector<2x8xf32>
    %132 = vector.shape_cast %131 : vector<2x8xf32> to vector<2x8x1xf32>
    %133 = vector.broadcast %132 : vector<2x8x1xf32> to vector<2x8x8xf32>
    %134 = arith.divf %130, %133 : vector<2x8x8xf32>
    %cst_55 = arith.constant 0.000000e+00 : f32
    %135 = vector.broadcast %cst_55 : f32 to vector<2x8x8xf32>
    %136 = arith.select %95, %134, %135 : vector<2x8x8xi1>, vector<2x8x8xf32>
    %137 = vector.shape_cast %136 : vector<2x8x8xf32> to vector<16x8xf32>
    "tpu.trace_start"() <{level = 10 : i32, message = "bqk,bkd->bqd"}> : () -> ()
    %cst_56 = arith.constant dense<0.000000e+00> : vector<2x8x8xf32>
    %138 = tpu.matmul %136, %122, %cst_56 {dimension_numbers = #tpu.dot_dimension_numbers<[2], [1], [1], [2], [0, 0, 0, 1, 1, 2], [0], [0]>} : vector<2x8x8xf32>, vector<2x8x8xf32>, vector<2x8x8xf32> -> vector<2x8x8xf32>
    "tpu.trace_stop"() : () -> ()
    %139 = vector.shape_cast %138 : vector<2x8x8xf32> to vector<16x8xf32>
    %c8 = arith.constant 8 : index
    %c0_57 = arith.constant 0 : index
    %140 = vector.load %arg9[%c8, %c0_57] : memref<32x32xf32, #tpu.memory_space<vmem>>, vector<8x32xf32>
    %cst_58 = arith.constant dense<0.000000e+00> : vector<16x32xf32>
    %141 = tpu.matmul %139, %140, %cst_58 {dimension_numbers = #tpu.dot_dimension_numbers<[1], [0], [0], [1], [0, 0, 1, 1], [], []>} : vector<16x8xf32>, vector<8x32xf32>, vector<16x32xf32> -> vector<16x32xf32>
    %142 = arith.addf %119, %141 : vector<16x32xf32>
    %143 = vector.extract_strided_slice %90 {offsets = [0, 0, 16], sizes = [2, 8, 8], strides = [1, 1, 1]} : vector<2x8x32xf32> to vector<2x8x8xf32>
    %144 = vector.extract_strided_slice %91 {offsets = [0, 0, 16], sizes = [2, 8, 8], strides = [1, 1, 1]} : vector<2x8x32xf32> to vector<2x8x8xf32>
    %145 = vector.extract_strided_slice %92 {offsets = [0, 0, 16], sizes = [2, 8, 8], strides = [1, 1, 1]} : vector<2x8x32xf32> to vector<2x8x8xf32>
    "tpu.trace_start"() <{level = 10 : i32, message = "bqd,bkd->bqk"}> : () -> ()
    %cst_59 = arith.constant dense<0.000000e+00> : vector<2x8x8xf32>
    %146 = tpu.matmul %143, %144, %cst_59 {dimension_numbers = #tpu.dot_dimension_numbers<[2], [2], [1], [1], [0, 0, 0, 1, 1, 1], [0], [0]>} : vector<2x8x8xf32>, vector<2x8x8xf32>, vector<2x8x8xf32> -> vector<2x8x8xf32>
    "tpu.trace_stop"() : () -> ()
    %cst_60 = arith.constant 0.353553385 : f32
    %147 = vector.broadcast %cst_60 : f32 to vector<2x8x8xf32>
    %148 = arith.mulf %146, %147 : vector<2x8x8xf32>
    %cst_61 = arith.constant dense<0xFF800000> : vector<2x8xf32>
    %149 = vector.multi_reduction <maximumf>, %148, %cst_61 [2] : vector<2x8x8xf32> to vector<2x8xf32>
    %150 = vector.shape_cast %149 : vector<2x8xf32> to vector<2x8x1xf32>
    %151 = vector.broadcast %150 : vector<2x8x1xf32> to vector<2x8x8xf32>
    %152 = arith.subf %148, %151 : vector<2x8x8xf32>
    %153 = math.exp %152 : vector<2x8x8xf32>
    %cst_62 = arith.constant dense<0.000000e+00> : vector<2x8xf32>
    %154 = vector.multi_reduction <add>, %153, %cst_62 [2] : vector<2x8x8xf32> to vector<2x8xf32>
    %155 = vector.shape_cast %154 : vector<2x8xf32> to vector<2x8x1xf32>
    %156 = vector.broadcast %155 : vector<2x8x1xf32> to vector<2x8x8xf32>
    %157 = arith.divf %153, %156 : vector<2x8x8xf32>
    %cst_63 = arith.constant 0.000000e+00 : f32
    %158 = vector.broadcast %cst_63 : f32 to vector<2x8x8xf32>
    %159 = arith.select %95, %157, %158 : vector<2x8x8xi1>, vector<2x8x8xf32>
    %160 = vector.shape_cast %159 : vector<2x8x8xf32> to vector<16x8xf32>
    "tpu.trace_start"() <{level = 10 : i32, message = "bqk,bkd->bqd"}> : () -> ()
    %cst_64 = arith.constant dense<0.000000e+00> : vector<2x8x8xf32>
    %161 = tpu.matmul %159, %145, %cst_64 {dimension_numbers = #tpu.dot_dimension_numbers<[2], [1], [1], [2], [0, 0, 0, 1, 1, 2], [0], [0]>} : vector<2x8x8xf32>, vector<2x8x8xf32>, vector<2x8x8xf32> -> vector<2x8x8xf32>
    "tpu.trace_stop"() : () -> ()
    %162 = vector.shape_cast %161 : vector<2x8x8xf32> to vector<16x8xf32>
    %c16 = arith.constant 16 : index
    %c0_65 = arith.constant 0 : index
    %163 = vector.load %arg9[%c16, %c0_65] : memref<32x32xf32, #tpu.memory_space<vmem>>, vector<8x32xf32>
    %cst_66 = arith.constant dense<0.000000e+00> : vector<16x32xf32>
    %164 = tpu.matmul %162, %163, %cst_66 {dimension_numbers = #tpu.dot_dimension_numbers<[1], [0], [0], [1], [0, 0, 1, 1], [], []>} : vector<16x8xf32>, vector<8x32xf32>, vector<16x32xf32> -> vector<16x32xf32>
    %165 = arith.addf %142, %164 : vector<16x32xf32>
    %166 = vector.extract_strided_slice %90 {offsets = [0, 0, 24], sizes = [2, 8, 8], strides = [1, 1, 1]} : vector<2x8x32xf32> to vector<2x8x8xf32>
    %167 = vector.extract_strided_slice %91 {offsets = [0, 0, 24], sizes = [2, 8, 8], strides = [1, 1, 1]} : vector<2x8x32xf32> to vector<2x8x8xf32>
    %168 = vector.extract_strided_slice %92 {offsets = [0, 0, 24], sizes = [2, 8, 8], strides = [1, 1, 1]} : vector<2x8x32xf32> to vector<2x8x8xf32>
    "tpu.trace_start"() <{level = 10 : i32, message = "bqd,bkd->bqk"}> : () -> ()
    %cst_67 = arith.constant dense<0.000000e+00> : vector<2x8x8xf32>
    %169 = tpu.matmul %166, %167, %cst_67 {dimension_numbers = #tpu.dot_dimension_numbers<[2], [2], [1], [1], [0, 0, 0, 1, 1, 1], [0], [0]>} : vector<2x8x8xf32>, vector<2x8x8xf32>, vector<2x8x8xf32> -> vector<2x8x8xf32>
    "tpu.trace_stop"() : () -> ()
    %cst_68 = arith.constant 0.353553385 : f32
    %170 = vector.broadcast %cst_68 : f32 to vector<2x8x8xf32>
    %171 = arith.mulf %169, %170 : vector<2x8x8xf32>
    %cst_69 = arith.constant dense<0xFF800000> : vector<2x8xf32>
    %172 = vector.multi_reduction <maximumf>, %171, %cst_69 [2] : vector<2x8x8xf32> to vector<2x8xf32>
    %173 = vector.shape_cast %172 : vector<2x8xf32> to vector<2x8x1xf32>
    %174 = vector.broadcast %173 : vector<2x8x1xf32> to vector<2x8x8xf32>
    %175 = arith.subf %171, %174 : vector<2x8x8xf32>
    %176 = math.exp %175 : vector<2x8x8xf32>
    %cst_70 = arith.constant dense<0.000000e+00> : vector<2x8xf32>
    %177 = vector.multi_reduction <add>, %176, %cst_70 [2] : vector<2x8x8xf32> to vector<2x8xf32>
    %178 = vector.shape_cast %177 : vector<2x8xf32> to vector<2x8x1xf32>
    %179 = vector.broadcast %178 : vector<2x8x1xf32> to vector<2x8x8xf32>
    %180 = arith.divf %176, %179 : vector<2x8x8xf32>
    %cst_71 = arith.constant 0.000000e+00 : f32
    %181 = vector.broadcast %cst_71 : f32 to vector<2x8x8xf32>
    %182 = arith.select %95, %180, %181 : vector<2x8x8xi1>, vector<2x8x8xf32>
    %183 = vector.shape_cast %182 : vector<2x8x8xf32> to vector<16x8xf32>
    "tpu.trace_start"() <{level = 10 : i32, message = "bqk,bkd->bqd"}> : () -> ()
    %cst_72 = arith.constant dense<0.000000e+00> : vector<2x8x8xf32>
    %184 = tpu.matmul %182, %168, %cst_72 {dimension_numbers = #tpu.dot_dimension_numbers<[2], [1], [1], [2], [0, 0, 0, 1, 1, 2], [0], [0]>} : vector<2x8x8xf32>, vector<2x8x8xf32>, vector<2x8x8xf32> -> vector<2x8x8xf32>
    "tpu.trace_stop"() : () -> ()
    %185 = vector.shape_cast %184 : vector<2x8x8xf32> to vector<16x8xf32>
    %c24 = arith.constant 24 : index
    %c0_73 = arith.constant 0 : index
    %186 = vector.load %arg9[%c24, %c0_73] : memref<32x32xf32, #tpu.memory_space<vmem>>, vector<8x32xf32>
    %cst_74 = arith.constant dense<0.000000e+00> : vector<16x32xf32>
    %187 = tpu.matmul %185, %186, %cst_74 {dimension_numbers = #tpu.dot_dimension_numbers<[1], [0], [0], [1], [0, 0, 1, 1], [], []>} : vector<16x8xf32>, vector<8x32xf32>, vector<16x32xf32> -> vector<16x32xf32>
    %188 = arith.addf %165, %187 : vector<16x32xf32>
    %189 = vector.shape_cast %188 : vector<16x32xf32> to vector<2x8x32xf32>
    %c0_75 = arith.constant 0 : index
    %c0_76 = arith.constant 0 : index
    %c0_77 = arith.constant 0 : index
    %190 = vector.load %arg11[%c0_75, %c0_76, %c0_77] : memref<2x8x32xf32, #tpu.memory_space<vmem>>, vector<2x8x32xf32>
    tpu.vector_store %arg11[%c0_75, %c0_76, %c0_77], %189 {strides = array<i32>} : memref<2x8x32xf32, #tpu.memory_space<vmem>>, vector<2x8x32xf32>,
    %191 = tpu.concatenate %114, %137, %160, %183 in 1 : vector<16x8xf32>, vector<16x8xf32>, vector<16x8xf32>, vector<16x8xf32> -> vector<16x32xf32>
    %192 = vector.shape_cast %191 : vector<16x32xf32> to vector<2x8x32xf32>
    %c0_78 = arith.constant 0 : index
    %c0_79 = arith.constant 0 : index
    %c0_80 = arith.constant 0 : index
    %193 = vector.load %arg13[%c0_78, %c0_79, %c0_80] : memref<2x8x32xf32, #tpu.memory_space<vmem>>, vector<2x8x32xf32>
    tpu.vector_store %arg13[%c0_78, %c0_79, %c0_80], %192 {strides = array<i32>} : memref<2x8x32xf32, #tpu.memory_space<vmem>>, vector<2x8x32xf32>,
    return
  }
  func.func @transform_0(%arg0: i32) -> (i32, i32, i32) {
    %c0_i32 = arith.constant 0 : i32
    %c0_i32_0 = arith.constant 0 : i32
    %c0_i32_1 = arith.constant 0 : i32
    return %arg0, %c0_i32, %c0_i32_0 : i32, i32, i32
  }
  func.func @transform_1(%arg0: i32) -> (i32, i32, i32) {
    %c0_i32 = arith.constant 0 : i32
    %c0_i32_0 = arith.constant 0 : i32
    %c0_i32_1 = arith.constant 0 : i32
    return %arg0, %c0_i32, %c0_i32_0 : i32, i32, i32
  }
  func.func @transform_2(%arg0: i32) -> (i32, i32, i32) {
    %c0_i32 = arith.constant 0 : i32
    %c0_i32_0 = arith.constant 0 : i32
    %c0_i32_1 = arith.constant 0 : i32
    return %arg0, %c0_i32, %c0_i32_0 : i32, i32, i32
  }
  func.func @transform_3(%arg0: i32) -> (i32, i32) {
    %c0_i32 = arith.constant 0 : i32
    %c0_i32_0 = arith.constant 0 : i32
    %c0_i32_1 = arith.constant 0 : i32
    return %c0_i32, %c0_i32_0 : i32, i32
  }
  func.func @transform_4(%arg0: i32) -> (i32, i32) {
    %c0_i32 = arith.constant 0 : i32
    %c0_i32_0 = arith.constant 0 : i32
    %c0_i32_1 = arith.constant 0 : i32
    return %c0_i32, %c0_i32_0 : i32, i32
  }
  func.func @transform_5(%arg0: i32) -> (i32, i32) {
    %c0_i32 = arith.constant 0 : i32
    %c0_i32_0 = arith.constant 0 : i32
    %c0_i32_1 = arith.constant 0 : i32
    return %c0_i32, %c0_i32_0 : i32, i32
  }
  func.func @transform_6(%arg0: i32) -> (i32, i32) {
    %c0_i32 = arith.constant 0 : i32
    %c0_i32_0 = arith.constant 0 : i32
    %c0_i32_1 = arith.constant 0 : i32
    return %c0_i32, %c0_i32_0 : i32, i32
  }
  func.func @transform_7(%arg0: i32) -> (i32, i32) {
    %c0_i32 = arith.constant 0 : i32
    %c0_i32_0 = arith.constant 0 : i32
    %c0_i32_1 = arith.constant 0 : i32
    return %c0_i32, %c0_i32_0 : i32, i32
  }
  func.func @transform_8(%arg0: i32) -> (i32, i32) {
    %c0_i32 = arith.constant 0 : i32
    %c0_i32_0 = arith.constant 0 : i32
    %c0_i32_1 = arith.constant 0 : i32
    return %c0_i32, %c0_i32_0 : i32, i32
  }
  func.func @transform_9(%arg0: i32) -> (i32, i32) {
    %c0_i32 = arith.constant 0 : i32
    %c0_i32_0 = arith.constant 0 : i32
    %c0_i32_1 = arith.constant 0 : i32
    return %c0_i32, %c0_i32_0 : i32, i32
  }
  func.func @transform_10(%arg0: i32) -> (i32, i32, i32) {
    %c0_i32 = arith.constant 0 : i32
    %c0_i32_0 = arith.constant 0 : i32
    %c0_i32_1 = arith.constant 0 : i32
    return %arg0, %c0_i32, %c0_i32_0 : i32, i32, i32
  }
  func.func @transform_11(%arg0: i32) -> (i32, i32, i32) {
    %c0_i32 = arith.constant 0 : i32
    %c0_i32_0 = arith.constant 0 : i32
    %c0_i32_1 = arith.constant 0 : i32
    return %arg0, %c0_i32, %c0_i32_0 : i32, i32, i32
  }
  func.func @transform_12(%arg0: i32) -> (i32, i32, i32) {
    %c0_i32 = arith.constant 0 : i32
    %c0_i32_0 = arith.constant 0 : i32
    %c0_i32_1 = arith.constant 0 : i32
    return %arg0, %c0_i32, %c0_i32_0 : i32, i32, i32
  }
}

</mosaic_0001>

<llo_original>
// kernel: multi_head_attention.1
$region0: #{multi_head_attention.1}
  #allocation0 [shape = 'u32[]', space=smem, size = 0x4, offset = 0x4, fixed_abs, tag = 'smem constant byte address 0x4 - core index']
  #allocation1 [shape = 'u32[72,128]{1,0:T(1,128)}', space=vmem, size = 0x9000, scoped, tag = 'internal scratch']
  %s0 = inlined_call_operand.vmem [shape: f32[2,8,32], index: 0, kind: input, shape index: {}]
  %s1 = inlined_call_operand.vmem [shape: f32[2,8,32], index: 1, kind: input, shape index: {}]
  %s2 = inlined_call_operand.vmem [shape: f32[2,8,32], index: 2, kind: input, shape index: {}]
  %s3 = inlined_call_operand.vmem [shape: f32[3,32], index: 3, kind: input, shape index: {}]
  %s4 = inlined_call_operand.vmem [shape: f32[3,32], index: 4, kind: input, shape index: {}]
  %s5 = inlined_call_operand.vmem [shape: f32[32,32], index: 5, kind: input, shape index: {}]
  %s6 = inlined_call_operand.vmem [shape: f32[32,32], index: 6, kind: input, shape index: {}]
  %s7 = inlined_call_operand.vmem [shape: f32[32,32], index: 7, kind: input, shape index: {}]
  %s8 = inlined_call_operand.vmem [shape: f32[32,32], index: 8, kind: input, shape index: {}]
  %s9 = inlined_call_operand.vmem [shape: f32[32,32], index: 9, kind: input, shape index: {}]
  %s10 = inlined_call_operand.hbm [shape: f32[2,8,32], index: 10, kind: output, shape index: {0}]
  %s11 = inlined_call_operand.hbm [shape: f32[2,8,32], index: 11, kind: output, shape index: {1}]
  %s12 = inlined_call_operand.vmem [shape: f32[2,8,32], index: 12, kind: output, shape index: {2}]
  %13 = xla_tuple %s10, %s11, %s12
  %s14 = sld [smem:[#allocation0]]
  $region66: #{multi_head_attention.1} parent=0
    _
  %s16 = ssub.s32 1, %s14
  %s17 = scalar_select 0, %s16, %s14
  $region1: #{multi_head_attention.1} parent=0
    #allocation2 [shape = 'u8[8192]{0}', space=vmem, size = 0x2000, scoped, tag = 'output window, operand 0, single buffered']
    #allocation3 [shape = 's32[1]{0}', space=sflag, size = 0x4, scoped, tag = 'scoped memory for multi_head_attention.1']
    #allocation4 [shape = 'u8[8192]{0}', space=vmem, size = 0x2000, scoped, tag = 'output window, operand 1, single buffered']
    #allocation5 [shape = 's32[1]{0}', space=sflag, size = 0x4, scoped, tag = 'scoped memory for multi_head_attention.1']
    %18 = vsyncpa [#allocation3], 0
    %19 = vsyncpa [#allocation5], 0
    // Predicated region
    $region2: #{multi_head_attention.1} parent=1 // pred_check
      _
    $region3: #{multi_head_attention.1} parent=1 // pred_check_branch
      %21 = sbr.rel (0) target = $region5
    $region4: #{multi_head_attention.1} parent=1 // pred_region
      _
    $region5: #{multi_head_attention.1} parent=1 // pred_fallthru
      _
    // Predicated region
    $region6: #{multi_head_attention.1} parent=1 // pred_check
      _
    $region7: #{multi_head_attention.1} parent=1 // pred_check_branch
      %23 = sbr.rel (0) target = $region9
    $region8: #{multi_head_attention.1} parent=1 // pred_region
      _
    $region9: #{multi_head_attention.1} parent=1 // pred_fallthru
      _
    // Predicated region
    $region10: #{multi_head_attention.1} parent=1 // pred_check
      _
    $region11: #{multi_head_attention.1} parent=1 // pred_check_branch
      %25 = sbr.rel (0) target = $region13
    $region12: #{multi_head_attention.1} parent=1 // pred_region
      _
    $region13: #{multi_head_attention.1} parent=1 // pred_fallthru
      _
    // Predicated region
    $region14: #{multi_head_attention.1} parent=1 // pred_check
      _
    $region15: #{multi_head_attention.1} parent=1 // pred_check_branch
      %27 = sbr.rel (0) target = $region17
    $region16: #{multi_head_attention.1} parent=1 // pred_region
      _
    $region17: #{multi_head_attention.1} parent=1 // pred_fallthru
      _
    // Predicated region
    $region18: #{multi_head_attention.1} parent=1 // pred_check
      _
    $region19: #{multi_head_attention.1} parent=1 // pred_check_branch
      %29 = sbr.rel (0) target = $region21
    $region20: #{multi_head_attention.1} parent=1 // pred_region
      _
    $region21: #{multi_head_attention.1} parent=1 // pred_fallthru
      _
    // Predicated region
    $region22: #{multi_head_attention.1} parent=1 // pred_check
      _
    $region23: #{multi_head_attention.1} parent=1 // pred_check_branch
      %31 = sbr.rel (0) target = $region25
    $region24: #{multi_head_attention.1} parent=1 // pred_region
      _
    $region25: #{multi_head_attention.1} parent=1 // pred_fallthru
      _
    // Predicated region
    $region26: #{multi_head_attention.1} parent=1 // pred_check
      _
    $region27: #{multi_head_attention.1} parent=1 // pred_check_branch
      %33 = sbr.rel (0) target = $region29
    $region28: #{multi_head_attention.1} parent=1 // pred_region
      _
    $region29: #{multi_head_attention.1} parent=1 // pred_fallthru
      _
    // Predicated region
    $region30: #{multi_head_attention.1} parent=1 // pred_check
      _
    $region31: #{multi_head_attention.1} parent=1 // pred_check_branch
      %35 = sbr.rel (0) target = $region33
    $region32: #{multi_head_attention.1} parent=1 // pred_region
      _
    $region33: #{multi_head_attention.1} parent=1 // pred_fallthru
      _
    // Predicated region
    $region34: #{multi_head_attention.1} parent=1 // pred_check
      _
    $region35: #{multi_head_attention.1} parent=1 // pred_check_branch
      %37 = sbr.rel (0) target = $region37
    $region36: #{multi_head_attention.1} parent=1 // pred_region
      _
    $region37: #{multi_head_attention.1} parent=1 // pred_fallthru
      _
    // Predicated region
    $region38: #{multi_head_attention.1} parent=1 // pred_check
      _
    $region39: #{multi_head_attention.1} parent=1 // pred_check_branch
      %39 = sbr.rel (0) target = $region41
    $region40: #{multi_head_attention.1} parent=1 // pred_region
      _
    $region41: #{multi_head_attention.1} parent=1 // pred_fallthru
      _
    %v40 = vld [vmem:[%s3] sm:$0x7]
    %v41 = vld [vmem:[%s4] sm:$0x7]
    %v42 = vld [vmem:[%s0] sm:$0xff]
    %v43 = vld [vmem:[%s0 + $0x8] sm:$0xff]
    %vm44 = vcmask 261120
    %v45 = vsel %vm44, %v42, 0.0
    %46 = vadd.xlane.f32.xlu0 %v45
    %v47 = vpop.xlane.xlu0 %46
    %v48 = vsel %vm44, %v43, 0.0
    %49 = vadd.xlane.f32.xlu0 %v48
    %v50 = vpop.xlane.xlu0 %49
    %v51 = vrcp.pop 32.0
    %v52 = vmul.f32 32.0, %v51
    %v53 = vsub.f32 1.0, %v52
    %v54 = vmul.f32 %v51, %v53
    %v55 = vadd.f32 %v51, %v54
    %vm56 = vweird.f32 %v51
    %v57 = vsel %vm56, %v51, %v55
    %v58 = vmul.f32 %v47, %v57
    %v59 = vmul.f32 %v50, %v57
    %v60 = vsub.f32 %v42, %v58
    %v61 = vsub.f32 %v43, %v59
    %v62 = vmul.f32 %v60, %v60
    %v63 = vmul.f32 %v61, %v61
    %v64 = vsel %vm44, %v62, 0.0
    %65 = vadd.xlane.f32.xlu0 %v64
    %v66 = vpop.xlane.xlu0 %65
    %v67 = vsel %vm44, %v63, 0.0
    %68 = vadd.xlane.f32.xlu0 %v67
    %v69 = vpop.xlane.xlu0 %68
    %v70 = vmul.f32 %v66, %v57
    %v71 = vmul.f32 %v69, %v57
    %v72 = vadd.f32 %v70, 1e-05
    %v73 = vadd.f32 %v71, 1e-05
    %v74 = vrsqrt.pop %v72
    %v75 = vmul.f32 %v74, %v72
    %v76 = vmul.f32 %v75, %v74
    %v77 = vmul.f32 0.5, %v76
    %v78 = vsub.f32 1.5, %v77
    %v79 = vmul.f32 %v74, %v78
    %vm80 = vweird.f32 %v72
    %vm81 = vweird.f32 %v74
    %vm82 = vmor %vm80, %vm81
    %v83 = vsel %vm82, %v74, %v79
    %v84 = vrsqrt.pop %v73
    %v85 = vmul.f32 %v84, %v73
    %v86 = vmul.f32 %v85, %v84
    %v87 = vmul.f32 0.5, %v86
    %v88 = vsub.f32 1.5, %v87
    %v89 = vmul.f32 %v84, %v88
    %vm90 = vweird.f32 %v73
    %vm91 = vweird.f32 %v84
    %vm92 = vmor %vm90, %vm91
    %v93 = vsel %vm92, %v84, %v89
    %v94 = vmul.f32 %v60, %v83
    %v95 = vmul.f32 %v61, %v93
    %v96 = vperm.slane %v40, 0
    %v97 = vmul.f32 %v94, %v96
    %v98 = vmul.f32 %v95, %v96
    %v99 = vperm.slane %v41, 0
    %v100 = vadd.f32 %v97, %v99
    %v101 = vadd.f32 %v98, %v99
    %v102 = vld [vmem:[%s1] sm:$0xff]
    %v103 = vld [vmem:[%s1 + $0x8] sm:$0xff]
    %v104 = vsel %vm44, %v102, 0.0
    %105 = vadd.xlane.f32.xlu0 %v104
    %v106 = vpop.xlane.xlu0 %105
    %v107 = vsel %vm44, %v103, 0.0
    %108 = vadd.xlane.f32.xlu0 %v107
    %v109 = vpop.xlane.xlu0 %108
    %v110 = vmul.f32 %v106, %v57
    %v111 = vmul.f32 %v109, %v57
    %v112 = vsub.f32 %v102, %v110
    %v113 = vsub.f32 %v103, %v111
    %v114 = vmul.f32 %v112, %v112
    %v115 = vmul.f32 %v113, %v113
    %v116 = vsel %vm44, %v114, 0.0
    %117 = vadd.xlane.f32.xlu0 %v116
    %v118 = vpop.xlane.xlu0 %117
    %v119 = vsel %vm44, %v115, 0.0
    %120 = vadd.xlane.f32.xlu0 %v119
    %v121 = vpop.xlane.xlu0 %120
    %v122 = vmul.f32 %v118, %v57
    %v123 = vmul.f32 %v121, %v57
    %v124 = vadd.f32 %v122, 1e-05
    %v125 = vadd.f32 %v123, 1e-05
    %v126 = vrsqrt.pop %v124
    %v127 = vmul.f32 %v126, %v124
    %v128 = vmul.f32 %v127, %v126
    %v129 = vmul.f32 0.5, %v128
    %v130 = vsub.f32 1.5, %v129
    %v131 = vmul.f32 %v126, %v130
    %vm132 = vweird.f32 %v124
    %vm133 = vweird.f32 %v126
    %vm134 = vmor %vm132, %vm133
    %v135 = vsel %vm134, %v126, %v131
    %v136 = vrsqrt.pop %v125
    %v137 = vmul.f32 %v136, %v125
    %v138 = vmul.f32 %v137, %v136
    %v139 = vmul.f32 0.5, %v138
    %v140 = vsub.f32 1.5, %v139
    %v141 = vmul.f32 %v136, %v140
    %vm142 = vweird.f32 %v125
    %vm143 = vweird.f32 %v136
    %vm144 = vmor %vm142, %vm143
    %v145 = vsel %vm144, %v136, %v141
    %v146 = vmul.f32 %v112, %v135
    %v147 = vmul.f32 %v113, %v145
    %v148 = vperm.slane %v40, 1
    %v149 = vmul.f32 %v146, %v148
    %v150 = vmul.f32 %v147, %v148
    %v151 = vperm.slane %v41, 1
    %v152 = vadd.f32 %v149, %v151
    %v153 = vadd.f32 %v150, %v151
    %v154 = vld [vmem:[%s2] sm:$0xff]
    %v155 = vld [vmem:[%s2 + $0x8] sm:$0xff]
    %v156 = vsel %vm44, %v154, 0.0
    %157 = vadd.xlane.f32.xlu0 %v156
    %v158 = vpop.xlane.xlu0 %157
    %v159 = vsel %vm44, %v155, 0.0
    %160 = vadd.xlane.f32.xlu0 %v159
    %v161 = vpop.xlane.xlu0 %160
    %v162 = vmul.f32 %v158, %v57
    %v163 = vmul.f32 %v161, %v57
    %v164 = vsub.f32 %v154, %v162
    %v165 = vsub.f32 %v155, %v163
    %v166 = vmul.f32 %v164, %v164
    %v167 = vmul.f32 %v165, %v165
    %v168 = vsel %vm44, %v166, 0.0
    %169 = vadd.xlane.f32.xlu0 %v168
    %v170 = vpop.xlane.xlu0 %169
    %v171 = vsel %vm44, %v167, 0.0
    %172 = vadd.xlane.f32.xlu0 %v171
    %v173 = vpop.xlane.xlu0 %172
    %v174 = vmul.f32 %v170, %v57
    %v175 = vmul.f32 %v173, %v57
    %v176 = vadd.f32 %v174, 1e-05
    %v177 = vadd.f32 %v175, 1e-05
    %v178 = vrsqrt.pop %v176
    %v179 = vmul.f32 %v178, %v176
    %v180 = vmul.f32 %v179, %v178
    %v181 = vmul.f32 0.5, %v180
    %v182 = vsub.f32 1.5, %v181
    %v183 = vmul.f32 %v178, %v182
    %vm184 = vweird.f32 %v176
    %vm185 = vweird.f32 %v178
    %vm186 = vmor %vm184, %vm185
    %v187 = vsel %vm186, %v178, %v183
    %v188 = vrsqrt.pop %v177
    %v189 = vmul.f32 %v188, %v177
    %v190 = vmul.f32 %v189, %v188
    %v191 = vmul.f32 0.5, %v190
    %v192 = vsub.f32 1.5, %v191
    %v193 = vmul.f32 %v188, %v192
    %vm194 = vweird.f32 %v177
    %vm195 = vweird.f32 %v188
    %vm196 = vmor %vm194, %vm195
    %v197 = vsel %vm196, %v188, %v193
    %v198 = vmul.f32 %v164, %v187
    %v199 = vmul.f32 %v165, %v197
    %v200 = vperm.slane %v40, 2
    %v201 = vmul.f32 %v198, %v200
    %v202 = vmul.f32 %v199, %v200
    %v203 = vperm.slane %v41, 2
    %v204 = vadd.f32 %v201, %v203
    %v205 = vadd.f32 %v202, %v203
    %v206 = vld [vmem:[%s5] sm:$0xff]
    %v207 = vld [vmem:[%s5 + $0x8] sm:$0xff]
    %v208 = vld [vmem:[%s5 + $0x10] sm:$0xff]
    %v209 = vld [vmem:[%s5 + $0x18] sm:$0xff]
    %v211 = vsel %vm44, %v100, 0
    %v214 = vsel %vm44, %v101, 0
    %216 = vmatpush.msra.mxu0 0.0
    %217 = vmatpush.msra.mxu0 0.0
    %218 = vmatpush.msra.mxu0 0.0
    %219 = vmatpush.msra.mxu0 0.0
    %220 = vmatpush.msra.mxu0 0.0
    %221 = vmatpush.msra.mxu0 0.0
    %222 = vmatpush.msra.mxu0 0.0
    %223 = vmatpush.msra.mxu0 0.0
    %224 = vmatpush.msra.mxu0 0.0
    %225 = vmatpush.msra.mxu0 0.0
    %226 = vmatpush.msra.mxu0 0.0
    %227 = vmatpush.msra.mxu0 0.0
    %228 = vmatpush.msra.mxu0 %v209
    %229 = vmatpush.msra.mxu0 %v208
    %230 = vmatpush.msra.mxu0 %v207
    %231 = vmatpush.msra.mxu0 %v206
    %232 = vmatmul.f32.gmra.mxu0 %v211
    %v233 = vpop.f32.mrf.mxu0
    %v234 = vadd.f32 0.0, %v233
    %235 = vmatmul.f32.gmra.mxu0 %v214
    %v236 = vpop.f32.mrf.mxu0
    %v237 = vadd.f32 0.0, %v236
    %238 = vdwg.mxu0
    %v239 = vld [vmem:[%s6] sm:$0xff]
    %v240 = vld [vmem:[%s6 + $0x8] sm:$0xff]
    %v241 = vld [vmem:[%s6 + $0x10] sm:$0xff]
    %v242 = vld [vmem:[%s6 + $0x18] sm:$0xff]
    %v244 = vsel %vm44, %v152, 0
    %v247 = vsel %vm44, %v153, 0
    %249 = vmatpush.msra.mxu0 0.0
    %250 = vmatpush.msra.mxu0 0.0
    %251 = vmatpush.msra.mxu0 0.0
    %252 = vmatpush.msra.mxu0 0.0
    %253 = vmatpush.msra.mxu0 0.0
    %254 = vmatpush.msra.mxu0 0.0
    %255 = vmatpush.msra.mxu0 0.0
    %256 = vmatpush.msra.mxu0 0.0
    %257 = vmatpush.msra.mxu0 0.0
    %258 = vmatpush.msra.mxu0 0.0
    %259 = vmatpush.msra.mxu0 0.0
    %260 = vmatpush.msra.mxu0 0.0
    %261 = vmatpush.msra.mxu0 %v242
    %262 = vmatpush.msra.mxu0 %v241
    %263 = vmatpush.msra.mxu0 %v240
    %264 = vmatpush.msra.mxu0 %v239
    %265 = vmatmul.f32.gmra.mxu0 %v244
    %v266 = vpop.f32.mrf.mxu0
    %v267 = vadd.f32 0.0, %v266
    %268 = vmatmul.f32.gmra.mxu0 %v247
    %v269 = vpop.f32.mrf.mxu0
    %v270 = vadd.f32 0.0, %v269
    %271 = vdwg.mxu0
    %v272 = vld [vmem:[%s7] sm:$0xff]
    %v273 = vld [vmem:[%s7 + $0x8] sm:$0xff]
    %v274 = vld [vmem:[%s7 + $0x10] sm:$0xff]
    %v275 = vld [vmem:[%s7 + $0x18] sm:$0xff]
    %v277 = vsel %vm44, %v204, 0
    %v280 = vsel %vm44, %v205, 0
    %282 = vmatpush.msra.mxu0 0.0
    %283 = vmatpush.msra.mxu0 0.0
    %284 = vmatpush.msra.mxu0 0.0
    %285 = vmatpush.msra.mxu0 0.0
    %286 = vmatpush.msra.mxu0 0.0
    %287 = vmatpush.msra.mxu0 0.0
    %288 = vmatpush.msra.mxu0 0.0
    %289 = vmatpush.msra.mxu0 0.0
    %290 = vmatpush.msra.mxu0 0.0
    %291 = vmatpush.msra.mxu0 0.0
    %292 = vmatpush.msra.mxu0 0.0
    %293 = vmatpush.msra.mxu0 0.0
    %294 = vmatpush.msra.mxu0 %v275
    %295 = vmatpush.msra.mxu0 %v274
    %296 = vmatpush.msra.mxu0 %v273
    %297 = vmatpush.msra.mxu0 %v272
    %298 = vmatmul.f32.gmra.mxu0 %v277
    %v299 = vpop.f32.mrf.mxu0
    %v300 = vadd.f32 0.0, %v299
    %301 = vmatmul.f32.gmra.mxu0 %v280
    %v302 = vpop.f32.mrf.mxu0
    %v303 = vadd.f32 0.0, %v302
    %304 = vdwg.mxu0
    %v305 = vld [vmem:[%s9] sm:$0xff]
    %v306 = vld [vmem:[%s9 + $0x8] sm:$0xff]
    %v307 = vld [vmem:[%s9 + $0x10] sm:$0xff]
    %v308 = vld [vmem:[%s9 + $0x18] sm:$0xff]
    %v310 = vsel %vm44, %v300, 0
    %v313 = vsel %vm44, %v303, 0
    %315 = vmatpush.msra.mxu0 0.0
    %316 = vmatpush.msra.mxu0 0.0
    %317 = vmatpush.msra.mxu0 0.0
    %318 = vmatpush.msra.mxu0 0.0
    %319 = vmatpush.msra.mxu0 0.0
    %320 = vmatpush.msra.mxu0 0.0
    %321 = vmatpush.msra.mxu0 0.0
    %322 = vmatpush.msra.mxu0 0.0
    %323 = vmatpush.msra.mxu0 0.0
    %324 = vmatpush.msra.mxu0 0.0
    %325 = vmatpush.msra.mxu0 0.0
    %326 = vmatpush.msra.mxu0 0.0
    %327 = vmatpush.msra.mxu0 %v308
    %328 = vmatpush.msra.mxu0 %v307
    %329 = vmatpush.msra.mxu0 %v306
    %330 = vmatpush.msra.mxu0 %v305
    %331 = vmatmul.f32.gmra.mxu0 %v310
    %v332 = vpop.f32.mrf.mxu0
    %v333 = vadd.f32 0.0, %v332
    %334 = vmatmul.f32.gmra.mxu0 %v313
    %v335 = vpop.f32.mrf.mxu0
    %v336 = vadd.f32 0.0, %v335
    %337 = vdwg.mxu0
    %338 = vst.msk [vmem:[#allocation4] sm:$0xff] %vm44, %v333
    %339 = vst.msk [vmem:[#allocation4 + $0x8] sm:$0xff] %vm44, %v336
    %v340 = vlaneseq
    %v341 = vshrl.u32 %v340, 7
    %v342 = vlaneseq
    %v343 = vand.u32 %v342, 127
    %vm344 = vcmp.ne.s32.totalorder %v341, %v343
    %vm345 = vcmask 64512
    %v347 = vsel %vm345, %v234, 0
    %v350 = vsel %vm345, %v267, 0
    %352 = vmatpush.xpose.msra.mxu0 0.0
    %353 = vmatpush.xpose.msra.mxu0 0.0
    %354 = vmatpush.xpose.msra.mxu0 0.0
    %355 = vmatpush.xpose.msra.mxu0 0.0
    %356 = vmatpush.xpose.msra.mxu0 0.0
    %357 = vmatpush.xpose.msra.mxu0 0.0
    %358 = vmatpush.xpose.msra.mxu0 0.0
    %359 = vmatpush.xpose.msra.mxu0 0.0
    %360 = vmatpush.xpose.msra.mxu0 0.0
    %361 = vmatpush.xpose.msra.mxu0 0.0
    %362 = vmatpush.xpose.msra.mxu0 0.0
    %363 = vmatpush.xpose.msra.mxu0 0.0
    %364 = vmatpush.xpose.msra.mxu0 0.0
    %365 = vmatpush.xpose.msra.mxu0 0.0
    %366 = vmatpush.xpose.msra.mxu0 0.0
    %367 = vmatpush.xpose.msra.mxu0 %v350
    %368 = vmatmul.f32.gmra.mxu0 %v347
    %v369 = vpop.f32.mrf.mxu0
    %v370 = vadd.f32 0.0, %v369
    %371 = vdwg.mxu0
    %v373 = vsel %vm345, %v237, 0
    %v376 = vsel %vm345, %v270, 0
    %378 = vmatpush.xpose.msra.mxu0 0.0
    %379 = vmatpush.xpose.msra.mxu0 0.0
    %380 = vmatpush.xpose.msra.mxu0 0.0
    %381 = vmatpush.xpose.msra.mxu0 0.0
    %382 = vmatpush.xpose.msra.mxu0 0.0
    %383 = vmatpush.xpose.msra.mxu0 0.0
    %384 = vmatpush.xpose.msra.mxu0 0.0
    %385 = vmatpush.xpose.msra.mxu0 0.0
    %386 = vmatpush.xpose.msra.mxu0 0.0
    %387 = vmatpush.xpose.msra.mxu0 0.0
    %388 = vmatpush.xpose.msra.mxu0 0.0
    %389 = vmatpush.xpose.msra.mxu0 0.0
    %390 = vmatpush.xpose.msra.mxu0 0.0
    %391 = vmatpush.xpose.msra.mxu0 0.0
    %392 = vmatpush.xpose.msra.mxu0 0.0
    %393 = vmatpush.xpose.msra.mxu0 %v376
    %394 = vmatmul.f32.gmra.mxu0 %v373
    %v395 = vpop.f32.mrf.mxu0
    %v396 = vadd.f32 0.0, %v395
    %397 = vdwg.mxu0
    %v398 = vmul.f32 %v370, 0.35355338
    %v399 = vmul.f32 %v396, 0.35355338
    %v400 = vsel %vm345, %v398, -inf
    %401 = vmax.xlane.f32.xlu0 %v400
    %v402 = vpop.xlane.xlu0 %401
    %v403 = vsel %vm345, %v399, -inf
    %404 = vmax.xlane.f32.xlu0 %v403
    %v405 = vpop.xlane.xlu0 %404
    %v406 = vsub.f32 %v398, %v402
    %v407 = vsub.f32 %v399, %v405
    %v408 = vmul.f32 %v406, 1.442695
    %v409 = vpow.pop %v408
    %v410 = vmul.f32 %v407, 1.442695
    %v411 = vpow.pop %v410
    %v412 = vsel %vm345, %v409, 0.0
    %413 = vadd.xlane.f32.xlu0 %v412
    %v414 = vpop.xlane.xlu0 %413
    %v415 = vsel %vm345, %v411, 0.0
    %416 = vadd.xlane.f32.xlu0 %v415
    %v417 = vpop.xlane.xlu0 %416
    %v418 = vrcp.pop %v414
    %v419 = vmul.f32 %v414, %v418
    %v420 = vsub.f32 1.0, %v419
    %v421 = vmul.f32 %v418, %v420
    %v422 = vadd.f32 %v418, %v421
    %vm423 = vweird.f32 %v414
    %vm424 = vweird.f32 %v418
    %vm425 = vmor %vm423, %vm424
    %v426 = vsel %vm425, %v418, %v422
    %v427 = vand.u32 2147483647, %v414
    %vm428 = vcmp.eq.f32.partialorder %v427, 8.507059e+37
    %v429 = vand.u32 %v414, 2147483648
    %v430 = vor.u32 1.1754944e-38, %v429
    %v431 = vsel %vm428, %v430, %v426
    %v432 = vmul.f32 %v409, %v431
    %v433 = vrcp.pop %v417
    %v434 = vmul.f32 %v417, %v433
    %v435 = vsub.f32 1.0, %v434
    %v436 = vmul.f32 %v433, %v435
    %v437 = vadd.f32 %v433, %v436
    %vm438 = vweird.f32 %v417
    %vm439 = vweird.f32 %v433
    %vm440 = vmor %vm438, %vm439
    %v441 = vsel %vm440, %v433, %v437
    %v442 = vand.u32 2147483647, %v417
    %vm443 = vcmp.eq.f32.partialorder %v442, 8.507059e+37
    %v444 = vand.u32 %v417, 2147483648
    %v445 = vor.u32 1.1754944e-38, %v444
    %v446 = vsel %vm443, %v445, %v441
    %v447 = vmul.f32 %v411, %v446
    %v448 = vsel %vm344, %v432, 0.0
    %v449 = vsel %vm344, %v447, 0.0
    %v451 = vsel %vm345, %v448, 0
    %453 = vmatpush.msra.mxu0 0.0
    %454 = vmatpush.msra.mxu0 0.0
    %455 = vmatpush.msra.mxu0 0.0
    %456 = vmatpush.msra.mxu0 0.0
    %457 = vmatpush.msra.mxu0 0.0
    %458 = vmatpush.msra.mxu0 0.0
    %459 = vmatpush.msra.mxu0 0.0
    %460 = vmatpush.msra.mxu0 0.0
    %461 = vmatpush.msra.mxu0 0.0
    %462 = vmatpush.msra.mxu0 0.0
    %463 = vmatpush.msra.mxu0 0.0
    %464 = vmatpush.msra.mxu0 0.0
    %465 = vmatpush.msra.mxu0 0.0
    %466 = vmatpush.msra.mxu0 0.0
    %467 = vmatpush.msra.mxu0 0.0
    %468 = vmatpush.msra.mxu0 %v300
    %469 = vmatmul.f32.gmra.mxu0 %v451
    %v470 = vpop.f32.mrf.mxu0
    %v471 = vadd.f32 0.0, %v470
    %472 = vdwg.mxu0
    %v474 = vsel %vm345, %v449, 0
    %476 = vmatpush.msra.mxu0 0.0
    %477 = vmatpush.msra.mxu0 0.0
    %478 = vmatpush.msra.mxu0 0.0
    %479 = vmatpush.msra.mxu0 0.0
    %480 = vmatpush.msra.mxu0 0.0
    %481 = vmatpush.msra.mxu0 0.0
    %482 = vmatpush.msra.mxu0 0.0
    %483 = vmatpush.msra.mxu0 0.0
    %484 = vmatpush.msra.mxu0 0.0
    %485 = vmatpush.msra.mxu0 0.0
    %486 = vmatpush.msra.mxu0 0.0
    %487 = vmatpush.msra.mxu0 0.0
    %488 = vmatpush.msra.mxu0 0.0
    %489 = vmatpush.msra.mxu0 0.0
    %490 = vmatpush.msra.mxu0 0.0
    %491 = vmatpush.msra.mxu0 %v303
    %492 = vmatmul.f32.gmra.mxu0 %v474
    %v493 = vpop.f32.mrf.mxu0
    %v494 = vadd.f32 0.0, %v493
    %495 = vdwg.mxu0
    %v496 = vld [vmem:[%s8] sm:$0xff]
    %497 = vrot.lane.b32.xlu0 %v234, 120
    %v498 = vpop.permute.xlu0 %497
    %499 = vrot.lane.b32.xlu0 %v267, 120
    %v500 = vpop.permute.xlu0 %499
    %v501 = vsel %vm345, %v498, 0
    %v503 = vsel %vm345, %v500, 0
    %505 = vmatpush.xpose.msra.mxu0 0.0
    %506 = vmatpush.xpose.msra.mxu0 0.0
    %507 = vmatpush.xpose.msra.mxu0 0.0
    %508 = vmatpush.xpose.msra.mxu0 0.0
    %509 = vmatpush.xpose.msra.mxu0 0.0
    %510 = vmatpush.xpose.msra.mxu0 0.0
    %511 = vmatpush.xpose.msra.mxu0 0.0
    %512 = vmatpush.xpose.msra.mxu0 0.0
    %513 = vmatpush.xpose.msra.mxu0 0.0
    %514 = vmatpush.xpose.msra.mxu0 0.0
    %515 = vmatpush.xpose.msra.mxu0 0.0
    %516 = vmatpush.xpose.msra.mxu0 0.0
    %517 = vmatpush.xpose.msra.mxu0 0.0
    %518 = vmatpush.xpose.msra.mxu0 0.0
    %519 = vmatpush.xpose.msra.mxu0 0.0
    %520 = vmatpush.xpose.msra.mxu0 %v503
    %521 = vmatmul.f32.gmra.mxu0 %v501
    %v522 = vpop.f32.mrf.mxu0
    %v523 = vadd.f32 0.0, %v522
    %524 = vdwg.mxu0
    %525 = vrot.lane.b32.xlu0 %v237, 120
    %v526 = vpop.permute.xlu0 %525
    %527 = vrot.lane.b32.xlu0 %v270, 120
    %v528 = vpop.permute.xlu0 %527
    %v529 = vsel %vm345, %v526, 0
    %v531 = vsel %vm345, %v528, 0
    %533 = vmatpush.xpose.msra.mxu0 0.0
    %534 = vmatpush.xpose.msra.mxu0 0.0
    %535 = vmatpush.xpose.msra.mxu0 0.0
    %536 = vmatpush.xpose.msra.mxu0 0.0
    %537 = vmatpush.xpose.msra.mxu0 0.0
    %538 = vmatpush.xpose.msra.mxu0 0.0
    %539 = vmatpush.xpose.msra.mxu0 0.0
    %540 = vmatpush.xpose.msra.mxu0 0.0
    %541 = vmatpush.xpose.msra.mxu0 0.0
    %542 = vmatpush.xpose.msra.mxu0 0.0
    %543 = vmatpush.xpose.msra.mxu0 0.0
    %544 = vmatpush.xpose.msra.mxu0 0.0
    %545 = vmatpush.xpose.msra.mxu0 0.0
    %546 = vmatpush.xpose.msra.mxu0 0.0
    %547 = vmatpush.xpose.msra.mxu0 0.0
    %548 = vmatpush.xpose.msra.mxu0 %v531
    %549 = vmatmul.f32.gmra.mxu0 %v529
    %v550 = vpop.f32.mrf.mxu0
    %v551 = vadd.f32 0.0, %v550
    %552 = vdwg.mxu0
    %v553 = vmul.f32 %v523, 0.35355338
    %v554 = vmul.f32 %v551, 0.35355338
    %v555 = vsel %vm345, %v553, -inf
    %556 = vmax.xlane.f32.xlu0 %v555
    %v557 = vpop.xlane.xlu0 %556
    %v558 = vsel %vm345, %v554, -inf
    %559 = vmax.xlane.f32.xlu0 %v558
    %v560 = vpop.xlane.xlu0 %559
    %v561 = vsub.f32 %v553, %v557
    %v562 = vsub.f32 %v554, %v560
    %v563 = vmul.f32 %v561, 1.442695
    %v564 = vpow.pop %v563
    %v565 = vmul.f32 %v562, 1.442695
    %v566 = vpow.pop %v565
    %v567 = vsel %vm345, %v564, 0.0
    %568 = vadd.xlane.f32.xlu0 %v567
    %v569 = vpop.xlane.xlu0 %568
    %v570 = vsel %vm345, %v566, 0.0
    %571 = vadd.xlane.f32.xlu0 %v570
    %v572 = vpop.xlane.xlu0 %571
    %v573 = vrcp.pop %v569
    %v574 = vmul.f32 %v569, %v573
    %v575 = vsub.f32 1.0, %v574
    %v576 = vmul.f32 %v573, %v575
    %v577 = vadd.f32 %v573, %v576
    %vm578 = vweird.f32 %v569
    %vm579 = vweird.f32 %v573
    %vm580 = vmor %vm578, %vm579
    %v581 = vsel %vm580, %v573, %v577
    %v582 = vand.u32 2147483647, %v569
    %vm583 = vcmp.eq.f32.partialorder %v582, 8.507059e+37
    %v584 = vand.u32 %v569, 2147483648
    %v585 = vor.u32 1.1754944e-38, %v584
    %v586 = vsel %vm583, %v585, %v581
    %v587 = vmul.f32 %v564, %v586
    %v588 = vrcp.pop %v572
    %v589 = vmul.f32 %v572, %v588
    %v590 = vsub.f32 1.0, %v589
    %v591 = vmul.f32 %v588, %v590
    %v592 = vadd.f32 %v588, %v591
    %vm593 = vweird.f32 %v572
    %vm594 = vweird.f32 %v588
    %vm595 = vmor %vm593, %vm594
    %v596 = vsel %vm595, %v588, %v592
    %v597 = vand.u32 2147483647, %v572
    %vm598 = vcmp.eq.f32.partialorder %v597, 8.507059e+37
    %v599 = vand.u32 %v572, 2147483648
    %v600 = vor.u32 1.1754944e-38, %v599
    %v601 = vsel %vm598, %v600, %v596
    %v602 = vmul.f32 %v566, %v601
    %v603 = vsel %vm344, %v587, 0.0
    %v604 = vsel %vm344, %v602, 0.0
    %605 = vrot.lane.b32.xlu0 %v300, 120
    %v606 = vpop.permute.xlu0 %605
    %v609 = vsel %vm345, %v603, 0
    %611 = vmatpush.msra.mxu0 0.0
    %612 = vmatpush.msra.mxu0 0.0
    %613 = vmatpush.msra.mxu0 0.0
    %614 = vmatpush.msra.mxu0 0.0
    %615 = vmatpush.msra.mxu0 0.0
    %616 = vmatpush.msra.mxu0 0.0
    %617 = vmatpush.msra.mxu0 0.0
    %618 = vmatpush.msra.mxu0 0.0
    %619 = vmatpush.msra.mxu0 0.0
    %620 = vmatpush.msra.mxu0 0.0
    %621 = vmatpush.msra.mxu0 0.0
    %622 = vmatpush.msra.mxu0 0.0
    %623 = vmatpush.msra.mxu0 0.0
    %624 = vmatpush.msra.mxu0 0.0
    %625 = vmatpush.msra.mxu0 0.0
    %626 = vmatpush.msra.mxu0 %v606
    %627 = vmatmul.f32.gmra.mxu0 %v609
    %v628 = vpop.f32.mrf.mxu0
    %v629 = vadd.f32 0.0, %v628
    %630 = vdwg.mxu0
    %631 = vrot.lane.b32.xlu0 %v303, 120
    %v632 = vpop.permute.xlu0 %631
    %v635 = vsel %vm345, %v604, 0
    %637 = vmatpush.msra.mxu0 0.0
    %638 = vmatpush.msra.mxu0 0.0
    %639 = vmatpush.msra.mxu0 0.0
    %640 = vmatpush.msra.mxu0 0.0
    %641 = vmatpush.msra.mxu0 0.0
    %642 = vmatpush.msra.mxu0 0.0
    %643 = vmatpush.msra.mxu0 0.0
    %644 = vmatpush.msra.mxu0 0.0
    %645 = vmatpush.msra.mxu0 0.0
    %646 = vmatpush.msra.mxu0 0.0
    %647 = vmatpush.msra.mxu0 0.0
    %648 = vmatpush.msra.mxu0 0.0
    %649 = vmatpush.msra.mxu0 0.0
    %650 = vmatpush.msra.mxu0 0.0
    %651 = vmatpush.msra.mxu0 0.0
    %652 = vmatpush.msra.mxu0 %v632
    %653 = vmatmul.f32.gmra.mxu0 %v635
    %v654 = vpop.f32.mrf.mxu0
    %v655 = vadd.f32 0.0, %v654
    %656 = vdwg.mxu0
    %v657 = vld [vmem:[%s8 + $0x8] sm:$0xff]
    %v659 = vsel %vm345, %v629, 0
    %v662 = vsel %vm345, %v655, 0
    %664 = vmatpush.msra.mxu0 0.0
    %665 = vmatpush.msra.mxu0 0.0
    %666 = vmatpush.msra.mxu0 0.0
    %667 = vmatpush.msra.mxu0 0.0
    %668 = vmatpush.msra.mxu0 0.0
    %669 = vmatpush.msra.mxu0 0.0
    %670 = vmatpush.msra.mxu0 0.0
    %671 = vmatpush.msra.mxu0 0.0
    %672 = vmatpush.msra.mxu0 0.0
    %673 = vmatpush.msra.mxu0 0.0
    %674 = vmatpush.msra.mxu0 0.0
    %675 = vmatpush.msra.mxu0 0.0
    %676 = vmatpush.msra.mxu0 0.0
    %677 = vmatpush.msra.mxu0 0.0
    %678 = vmatpush.msra.mxu0 0.0
    %679 = vmatpush.msra.mxu0 %v657
    %680 = vmatmul.f32.gmra.mxu0 %v659
    %v681 = vpop.f32.mrf.mxu0
    %v682 = vadd.f32 0.0, %v681
    %683 = vmatmul.f32.gmra.mxu0 %v662
    %v684 = vpop.f32.mrf.mxu0
    %v685 = vadd.f32 0.0, %v684
    %686 = vdwg.mxu0
    %v688 = vsel %vm345, %v471, 0
    %v691 = vsel %vm345, %v494, 0
    %693 = vmatpush.msra.mxu0 0.0
    %694 = vmatpush.msra.mxu0 0.0
    %695 = vmatpush.msra.mxu0 0.0
    %696 = vmatpush.msra.mxu0 0.0
    %697 = vmatpush.msra.mxu0 0.0
    %698 = vmatpush.msra.mxu0 0.0
    %699 = vmatpush.msra.mxu0 0.0
    %700 = vmatpush.msra.mxu0 0.0
    %701 = vmatpush.msra.mxu0 0.0
    %702 = vmatpush.msra.mxu0 0.0
    %703 = vmatpush.msra.mxu0 0.0
    %704 = vmatpush.msra.mxu0 0.0
    %705 = vmatpush.msra.mxu0 0.0
    %706 = vmatpush.msra.mxu0 0.0
    %707 = vmatpush.msra.mxu0 0.0
    %708 = vmatpush.msra.mxu0 %v496
    %709 = vmatmul.f32.gmra.mxu0 %v688
    %v710 = vpop.f32.mrf.mxu0
    %v711 = vadd.f32 %v682, %v710
    %712 = vmatmul.f32.gmra.mxu0 %v691
    %v713 = vpop.f32.mrf.mxu0
    %v714 = vadd.f32 %v685, %v713
    %715 = vdwg.mxu0
    %716 = vrot.lane.b32.xlu0 %v234, 112
    %v717 = vpop.permute.xlu0 %716
    %718 = vrot.lane.b32.xlu0 %v267, 112
    %v719 = vpop.permute.xlu0 %718
    %v720 = vsel %vm345, %v717, 0
    %v722 = vsel %vm345, %v719, 0
    %724 = vmatpush.xpose.msra.mxu0 0.0
    %725 = vmatpush.xpose.msra.mxu0 0.0
    %726 = vmatpush.xpose.msra.mxu0 0.0
    %727 = vmatpush.xpose.msra.mxu0 0.0
    %728 = vmatpush.xpose.msra.mxu0 0.0
    %729 = vmatpush.xpose.msra.mxu0 0.0
    %730 = vmatpush.xpose.msra.mxu0 0.0
    %731 = vmatpush.xpose.msra.mxu0 0.0
    %732 = vmatpush.xpose.msra.mxu0 0.0
    %733 = vmatpush.xpose.msra.mxu0 0.0
    %734 = vmatpush.xpose.msra.mxu0 0.0
    %735 = vmatpush.xpose.msra.mxu0 0.0
    %736 = vmatpush.xpose.msra.mxu0 0.0
    %737 = vmatpush.xpose.msra.mxu0 0.0
    %738 = vmatpush.xpose.msra.mxu0 0.0
    %739 = vmatpush.xpose.msra.mxu0 %v722
    %740 = vmatmul.f32.gmra.mxu0 %v720
    %v741 = vpop.f32.mrf.mxu0
    %v742 = vadd.f32 0.0, %v741
    %743 = vdwg.mxu0
    %744 = vrot.lane.b32.xlu0 %v237, 112
    %v745 = vpop.permute.xlu0 %744
    %746 = vrot.lane.b32.xlu0 %v270, 112
    %v747 = vpop.permute.xlu0 %746
    %v748 = vsel %vm345, %v745, 0
    %v750 = vsel %vm345, %v747, 0
    %752 = vmatpush.xpose.msra.mxu0 0.0
    %753 = vmatpush.xpose.msra.mxu0 0.0
    %754 = vmatpush.xpose.msra.mxu0 0.0
    %755 = vmatpush.xpose.msra.mxu0 0.0
    %756 = vmatpush.xpose.msra.mxu0 0.0
    %757 = vmatpush.xpose.msra.mxu0 0.0
    %758 = vmatpush.xpose.msra.mxu0 0.0
    %759 = vmatpush.xpose.msra.mxu0 0.0
    %760 = vmatpush.xpose.msra.mxu0 0.0
    %761 = vmatpush.xpose.msra.mxu0 0.0
    %762 = vmatpush.xpose.msra.mxu0 0.0
    %763 = vmatpush.xpose.msra.mxu0 0.0
    %764 = vmatpush.xpose.msra.mxu0 0.0
    %765 = vmatpush.xpose.msra.mxu0 0.0
    %766 = vmatpush.xpose.msra.mxu0 0.0
    %767 = vmatpush.xpose.msra.mxu0 %v750
    %768 = vmatmul.f32.gmra.mxu0 %v748
    %v769 = vpop.f32.mrf.mxu0
    %v770 = vadd.f32 0.0, %v769
    %771 = vdwg.mxu0
    %v772 = vmul.f32 %v742, 0.35355338
    %v773 = vmul.f32 %v770, 0.35355338
    %v774 = vsel %vm345, %v772, -inf
    %775 = vmax.xlane.f32.xlu0 %v774
    %v776 = vpop.xlane.xlu0 %775
    %v777 = vsel %vm345, %v773, -inf
    %778 = vmax.xlane.f32.xlu0 %v777
    %v779 = vpop.xlane.xlu0 %778
    %v780 = vsub.f32 %v772, %v776
    %v781 = vsub.f32 %v773, %v779
    %v782 = vmul.f32 %v780, 1.442695
    %v783 = vpow.pop %v782
    %v784 = vmul.f32 %v781, 1.442695
    %v785 = vpow.pop %v784
    %v786 = vsel %vm345, %v783, 0.0
    %787 = vadd.xlane.f32.xlu0 %v786
    %v788 = vpop.xlane.xlu0 %787
    %v789 = vsel %vm345, %v785, 0.0
    %790 = vadd.xlane.f32.xlu0 %v789
    %v791 = vpop.xlane.xlu0 %790
    %v792 = vrcp.pop %v788
    %v793 = vmul.f32 %v788, %v792
    %v794 = vsub.f32 1.0, %v793
    %v795 = vmul.f32 %v792, %v794
    %v796 = vadd.f32 %v792, %v795
    %vm797 = vweird.f32 %v788
    %vm798 = vweird.f32 %v792
    %vm799 = vmor %vm797, %vm798
    %v800 = vsel %vm799, %v792, %v796
    %v801 = vand.u32 2147483647, %v788
    %vm802 = vcmp.eq.f32.partialorder %v801, 8.507059e+37
    %v803 = vand.u32 %v788, 2147483648
    %v804 = vor.u32 1.1754944e-38, %v803
    %v805 = vsel %vm802, %v804, %v800
    %v806 = vmul.f32 %v783, %v805
    %v807 = vrcp.pop %v791
    %v808 = vmul.f32 %v791, %v807
    %v809 = vsub.f32 1.0, %v808
    %v810 = vmul.f32 %v807, %v809
    %v811 = vadd.f32 %v807, %v810
    %vm812 = vweird.f32 %v791
    %vm813 = vweird.f32 %v807
    %vm814 = vmor %vm812, %vm813
    %v815 = vsel %vm814, %v807, %v811
    %v816 = vand.u32 2147483647, %v791
    %vm817 = vcmp.eq.f32.partialorder %v816, 8.507059e+37
    %v818 = vand.u32 %v791, 2147483648
    %v819 = vor.u32 1.1754944e-38, %v818
    %v820 = vsel %vm817, %v819, %v815
    %v821 = vmul.f32 %v785, %v820
    %v822 = vsel %vm344, %v806, 0.0
    %v823 = vsel %vm344, %v821, 0.0
    %824 = vrot.lane.b32.xlu0 %v300, 112
    %v825 = vpop.permute.xlu0 %824
    %v828 = vsel %vm345, %v822, 0
    %830 = vmatpush.msra.mxu0 0.0
    %831 = vmatpush.msra.mxu0 0.0
    %832 = vmatpush.msra.mxu0 0.0
    %833 = vmatpush.msra.mxu0 0.0
    %834 = vmatpush.msra.mxu0 0.0
    %835 = vmatpush.msra.mxu0 0.0
    %836 = vmatpush.msra.mxu0 0.0
    %837 = vmatpush.msra.mxu0 0.0
    %838 = vmatpush.msra.mxu0 0.0
    %839 = vmatpush.msra.mxu0 0.0
    %840 = vmatpush.msra.mxu0 0.0
    %841 = vmatpush.msra.mxu0 0.0
    %842 = vmatpush.msra.mxu0 0.0
    %843 = vmatpush.msra.mxu0 0.0
    %844 = vmatpush.msra.mxu0 0.0
    %845 = vmatpush.msra.mxu0 %v825
    %846 = vmatmul.f32.gmra.mxu0 %v828
    %v847 = vpop.f32.mrf.mxu0
    %v848 = vadd.f32 0.0, %v847
    %849 = vdwg.mxu0
    %850 = vrot.lane.b32.xlu0 %v303, 112
    %v851 = vpop.permute.xlu0 %850
    %v854 = vsel %vm345, %v823, 0
    %856 = vmatpush.msra.mxu0 0.0
    %857 = vmatpush.msra.mxu0 0.0
    %858 = vmatpush.msra.mxu0 0.0
    %859 = vmatpush.msra.mxu0 0.0
    %860 = vmatpush.msra.mxu0 0.0
    %861 = vmatpush.msra.mxu0 0.0
    %862 = vmatpush.msra.mxu0 0.0
    %863 = vmatpush.msra.mxu0 0.0
    %864 = vmatpush.msra.mxu0 0.0
    %865 = vmatpush.msra.mxu0 0.0
    %866 = vmatpush.msra.mxu0 0.0
    %867 = vmatpush.msra.mxu0 0.0
    %868 = vmatpush.msra.mxu0 0.0
    %869 = vmatpush.msra.mxu0 0.0
    %870 = vmatpush.msra.mxu0 0.0
    %871 = vmatpush.msra.mxu0 %v851
    %872 = vmatmul.f32.gmra.mxu0 %v854
    %v873 = vpop.f32.mrf.mxu0
    %v874 = vadd.f32 0.0, %v873
    %875 = vdwg.mxu0
    %v876 = vld [vmem:[%s8 + $0x10] sm:$0xff]
    %v878 = vsel %vm345, %v848, 0
    %v881 = vsel %vm345, %v874, 0
    %883 = vmatpush.msra.mxu0 0.0
    %884 = vmatpush.msra.mxu0 0.0
    %885 = vmatpush.msra.mxu0 0.0
    %886 = vmatpush.msra.mxu0 0.0
    %887 = vmatpush.msra.mxu0 0.0
    %888 = vmatpush.msra.mxu0 0.0
    %889 = vmatpush.msra.mxu0 0.0
    %890 = vmatpush.msra.mxu0 0.0
    %891 = vmatpush.msra.mxu0 0.0
    %892 = vmatpush.msra.mxu0 0.0
    %893 = vmatpush.msra.mxu0 0.0
    %894 = vmatpush.msra.mxu0 0.0
    %895 = vmatpush.msra.mxu0 0.0
    %896 = vmatpush.msra.mxu0 0.0
    %897 = vmatpush.msra.mxu0 0.0
    %898 = vmatpush.msra.mxu0 %v876
    %899 = vmatmul.f32.gmra.mxu0 %v878
    %v900 = vpop.f32.mrf.mxu0
    %v901 = vadd.f32 0.0, %v900
    %902 = vmatmul.f32.gmra.mxu0 %v881
    %v903 = vpop.f32.mrf.mxu0
    %v904 = vadd.f32 0.0, %v903
    %905 = vdwg.mxu0
    %v906 = vadd.f32 %v711, %v901
    %v907 = vadd.f32 %v714, %v904
    %908 = vrot.lane.b32.xlu0 %v234, 104
    %v909 = vpop.permute.xlu0 %908
    %910 = vrot.lane.b32.xlu0 %v267, 104
    %v911 = vpop.permute.xlu0 %910
    %v912 = vsel %vm345, %v909, 0
    %v914 = vsel %vm345, %v911, 0
    %916 = vmatpush.xpose.msra.mxu0 0.0
    %917 = vmatpush.xpose.msra.mxu0 0.0
    %918 = vmatpush.xpose.msra.mxu0 0.0
    %919 = vmatpush.xpose.msra.mxu0 0.0
    %920 = vmatpush.xpose.msra.mxu0 0.0
    %921 = vmatpush.xpose.msra.mxu0 0.0
    %922 = vmatpush.xpose.msra.mxu0 0.0
    %923 = vmatpush.xpose.msra.mxu0 0.0
    %924 = vmatpush.xpose.msra.mxu0 0.0
    %925 = vmatpush.xpose.msra.mxu0 0.0
    %926 = vmatpush.xpose.msra.mxu0 0.0
    %927 = vmatpush.xpose.msra.mxu0 0.0
    %928 = vmatpush.xpose.msra.mxu0 0.0
    %929 = vmatpush.xpose.msra.mxu0 0.0
    %930 = vmatpush.xpose.msra.mxu0 0.0
    %931 = vmatpush.xpose.msra.mxu0 %v914
    %932 = vmatmul.f32.gmra.mxu0 %v912
    %v933 = vpop.f32.mrf.mxu0
    %v934 = vadd.f32 0.0, %v933
    %935 = vdwg.mxu0
    %936 = vrot.lane.b32.xlu0 %v237, 104
    %v937 = vpop.permute.xlu0 %936
    %938 = vrot.lane.b32.xlu0 %v270, 104
    %v939 = vpop.permute.xlu0 %938
    %v940 = vsel %vm345, %v937, 0
    %v942 = vsel %vm345, %v939, 0
    %944 = vmatpush.xpose.msra.mxu0 0.0
    %945 = vmatpush.xpose.msra.mxu0 0.0
    %946 = vmatpush.xpose.msra.mxu0 0.0
    %947 = vmatpush.xpose.msra.mxu0 0.0
    %948 = vmatpush.xpose.msra.mxu0 0.0
    %949 = vmatpush.xpose.msra.mxu0 0.0
    %950 = vmatpush.xpose.msra.mxu0 0.0
    %951 = vmatpush.xpose.msra.mxu0 0.0
    %952 = vmatpush.xpose.msra.mxu0 0.0
    %953 = vmatpush.xpose.msra.mxu0 0.0
    %954 = vmatpush.xpose.msra.mxu0 0.0
    %955 = vmatpush.xpose.msra.mxu0 0.0
    %956 = vmatpush.xpose.msra.mxu0 0.0
    %957 = vmatpush.xpose.msra.mxu0 0.0
    %958 = vmatpush.xpose.msra.mxu0 0.0
    %959 = vmatpush.xpose.msra.mxu0 %v942
    %960 = vmatmul.f32.gmra.mxu0 %v940
    %v961 = vpop.f32.mrf.mxu0
    %v962 = vadd.f32 0.0, %v961
    %963 = vdwg.mxu0
    %v964 = vmul.f32 %v934, 0.35355338
    %v965 = vmul.f32 %v962, 0.35355338
    %v966 = vsel %vm345, %v964, -inf
    %967 = vmax.xlane.f32.xlu0 %v966
    %v968 = vpop.xlane.xlu0 %967
    %v969 = vsel %vm345, %v965, -inf
    %970 = vmax.xlane.f32.xlu0 %v969
    %v971 = vpop.xlane.xlu0 %970
    %v972 = vsub.f32 %v964, %v968
    %v973 = vsub.f32 %v965, %v971
    %v974 = vmul.f32 %v972, 1.442695
    %v975 = vpow.pop %v974
    %v976 = vmul.f32 %v973, 1.442695
    %v977 = vpow.pop %v976
    %v978 = vsel %vm345, %v975, 0.0
    %979 = vadd.xlane.f32.xlu0 %v978
    %v980 = vpop.xlane.xlu0 %979
    %v981 = vsel %vm345, %v977, 0.0
    %982 = vadd.xlane.f32.xlu0 %v981
    %v983 = vpop.xlane.xlu0 %982
    %v984 = vrcp.pop %v980
    %v985 = vmul.f32 %v980, %v984
    %v986 = vsub.f32 1.0, %v985
    %v987 = vmul.f32 %v984, %v986
    %v988 = vadd.f32 %v984, %v987
    %vm989 = vweird.f32 %v980
    %vm990 = vweird.f32 %v984
    %vm991 = vmor %vm989, %vm990
    %v992 = vsel %vm991, %v984, %v988
    %v993 = vand.u32 2147483647, %v980
    %vm994 = vcmp.eq.f32.partialorder %v993, 8.507059e+37
    %v995 = vand.u32 %v980, 2147483648
    %v996 = vor.u32 1.1754944e-38, %v995
    %v997 = vsel %vm994, %v996, %v992
    %v998 = vmul.f32 %v975, %v997
    %v999 = vrcp.pop %v983
    %v1000 = vmul.f32 %v983, %v999
    %v1001 = vsub.f32 1.0, %v1000
    %v1002 = vmul.f32 %v999, %v1001
    %v1003 = vadd.f32 %v999, %v1002
    %vm1004 = vweird.f32 %v983
    %vm1005 = vweird.f32 %v999
    %vm1006 = vmor %vm1004, %vm1005
    %v1007 = vsel %vm1006, %v999, %v1003
    %v1008 = vand.u32 2147483647, %v983
    %vm1009 = vcmp.eq.f32.partialorder %v1008, 8.507059e+37
    %v1010 = vand.u32 %v983, 2147483648
    %v1011 = vor.u32 1.1754944e-38, %v1010
    %v1012 = vsel %vm1009, %v1011, %v1007
    %v1013 = vmul.f32 %v977, %v1012
    %v1014 = vsel %vm344, %v998, 0.0
    %v1015 = vsel %vm344, %v1013, 0.0
    %1016 = vrot.lane.b32.xlu0 %v300, 104
    %v1017 = vpop.permute.xlu0 %1016
    %v1020 = vsel %vm345, %v1014, 0
    %1022 = vmatpush.msra.mxu0 0.0
    %1023 = vmatpush.msra.mxu0 0.0
    %1024 = vmatpush.msra.mxu0 0.0
    %1025 = vmatpush.msra.mxu0 0.0
    %1026 = vmatpush.msra.mxu0 0.0
    %1027 = vmatpush.msra.mxu0 0.0
    %1028 = vmatpush.msra.mxu0 0.0
    %1029 = vmatpush.msra.mxu0 0.0
    %1030 = vmatpush.msra.mxu0 0.0
    %1031 = vmatpush.msra.mxu0 0.0
    %1032 = vmatpush.msra.mxu0 0.0
    %1033 = vmatpush.msra.mxu0 0.0
    %1034 = vmatpush.msra.mxu0 0.0
    %1035 = vmatpush.msra.mxu0 0.0
    %1036 = vmatpush.msra.mxu0 0.0
    %1037 = vmatpush.msra.mxu0 %v1017
    %1038 = vmatmul.f32.gmra.mxu0 %v1020
    %v1039 = vpop.f32.mrf.mxu0
    %v1040 = vadd.f32 0.0, %v1039
    %1041 = vdwg.mxu0
    %1042 = vrot.lane.b32.xlu0 %v303, 104
    %v1043 = vpop.permute.xlu0 %1042
    %v1046 = vsel %vm345, %v1015, 0
    %1048 = vmatpush.msra.mxu0 0.0
    %1049 = vmatpush.msra.mxu0 0.0
    %1050 = vmatpush.msra.mxu0 0.0
    %1051 = vmatpush.msra.mxu0 0.0
    %1052 = vmatpush.msra.mxu0 0.0
    %1053 = vmatpush.msra.mxu0 0.0
    %1054 = vmatpush.msra.mxu0 0.0
    %1055 = vmatpush.msra.mxu0 0.0
    %1056 = vmatpush.msra.mxu0 0.0
    %1057 = vmatpush.msra.mxu0 0.0
    %1058 = vmatpush.msra.mxu0 0.0
    %1059 = vmatpush.msra.mxu0 0.0
    %1060 = vmatpush.msra.mxu0 0.0
    %1061 = vmatpush.msra.mxu0 0.0
    %1062 = vmatpush.msra.mxu0 0.0
    %1063 = vmatpush.msra.mxu0 %v1043
    %1064 = vmatmul.f32.gmra.mxu0 %v1046
    %v1065 = vpop.f32.mrf.mxu0
    %v1066 = vadd.f32 0.0, %v1065
    %1067 = vdwg.mxu0
    %v1068 = vld [vmem:[%s8 + $0x18] sm:$0xff]
    %v1070 = vsel %vm345, %v1040, 0
    %v1073 = vsel %vm345, %v1066, 0
    %1075 = vmatpush.msra.mxu0 0.0
    %1076 = vmatpush.msra.mxu0 0.0
    %1077 = vmatpush.msra.mxu0 0.0
    %1078 = vmatpush.msra.mxu0 0.0
    %1079 = vmatpush.msra.mxu0 0.0
    %1080 = vmatpush.msra.mxu0 0.0
    %1081 = vmatpush.msra.mxu0 0.0
    %1082 = vmatpush.msra.mxu0 0.0
    %1083 = vmatpush.msra.mxu0 0.0
    %1084 = vmatpush.msra.mxu0 0.0
    %1085 = vmatpush.msra.mxu0 0.0
    %1086 = vmatpush.msra.mxu0 0.0
    %1087 = vmatpush.msra.mxu0 0.0
    %1088 = vmatpush.msra.mxu0 0.0
    %1089 = vmatpush.msra.mxu0 0.0
    %1090 = vmatpush.msra.mxu0 %v1068
    %1091 = vmatmul.f32.gmra.mxu0 %v1070
    %v1092 = vpop.f32.mrf.mxu0
    %v1093 = vadd.f32 0.0, %v1092
    %1094 = vmatmul.f32.gmra.mxu0 %v1073
    %v1095 = vpop.f32.mrf.mxu0
    %v1096 = vadd.f32 0.0, %v1095
    %1097 = vdwg.mxu0
    %v1098 = vadd.f32 %v906, %v1093
    %v1099 = vadd.f32 %v907, %v1096
    %1100 = vst.msk [vmem:[#allocation2] sm:$0xff] %vm44, %v1098
    %1101 = vst.msk [vmem:[#allocation2 + $0x8] sm:$0xff] %vm44, %v1099
    %1102 = vrot.lane.b32.xlu0 %v603, 8
    %v1103 = vpop.permute.xlu0 %1102
    %1104 = vrot.lane.b32.xlu0 %v604, 8
    %v1105 = vpop.permute.xlu0 %1104
    %1108 = vrot.lane.b32.xlu0 %v822, 16
    %v1109 = vpop.permute.xlu0 %1108
    %1110 = vrot.lane.b32.xlu0 %v823, 16
    %v1111 = vpop.permute.xlu0 %1110
    %1114 = vrot.lane.b32.xlu0 %v1014, 24
    %v1115 = vpop.permute.xlu0 %1114
    %1116 = vrot.lane.b32.xlu0 %v1015, 24
    %v1117 = vpop.permute.xlu0 %1116
    %v1120 = vsel %vm345, %v448, %v1103
    %v1121 = vsel %vm345, %v449, %v1105
    %vm1122 = vcmask 130048
    %v1123 = vsel %vm1122, %v1120, %v1109
    %v1124 = vsel %vm1122, %v1121, %v1111
    %vm1125 = vcmask 195584
    %v1126 = vsel %vm1125, %v1123, %v1115
    %v1127 = vsel %vm1125, %v1124, %v1117
    %1128 = vst.msk [vmem:[%s12] sm:$0xff] %vm44, %v1126
    %1129 = vst.msk [vmem:[%s12 + $0x8] sm:$0xff] %vm44, %v1127
    // Predicated region
    $region42: #{multi_head_attention.1} parent=1 // pred_check
      _
    $region43: #{multi_head_attention.1} parent=1 // pred_check_branch
      %1131 = sbr.rel (0) target = $region45
    $region44: #{multi_head_attention.1} parent=1 // pred_region
      %1133 = vsyncadd [#allocation3], 0
      %s1134 = sshll.u32 [#allocation2], 4
      %s1135 = int_to_ptr.vmem [resolvable:$true] %s1134
      %s1136 = sshll.u32 %s10, 4
      %s1137 = int_to_ptr.hbm [resolvable:$true] %s1136
      %1142 = dma.vmem_to_hbm [thread:$0]  %s1135, 256, %s1137, [#allocation3], 128, 128, 8
    $region45: #{multi_head_attention.1} parent=1 // pred_fallthru
      _
    // Predicated region
    $region46: #{multi_head_attention.1} parent=1 // pred_check
      _
    $region47: #{multi_head_attention.1} parent=1 // pred_check_branch
      %1144 = sbr.rel (0) target = $region49
    $region48: #{multi_head_attention.1} parent=1 // pred_region
      %1146 = vsyncadd [#allocation5], 0
      %s1147 = sshll.u32 [#allocation4], 4
      %s1148 = int_to_ptr.vmem [resolvable:$true] %s1147
      %s1149 = sshll.u32 %s11, 4
      %s1150 = int_to_ptr.hbm [resolvable:$true] %s1149
      %1155 = dma.vmem_to_hbm [thread:$0]  %s1148, 256, %s1150, [#allocation5], 128, 128, 8
    $region49: #{multi_head_attention.1} parent=1 // pred_fallthru
      _
    // Predicated region
    $region50: #{multi_head_attention.1} parent=1 // pred_check
      _
    $region51: #{multi_head_attention.1} parent=1 // pred_check_branch
      %1157 = sbr.rel (0) target = $region53
    $region52: #{multi_head_attention.1} parent=1 // pred_region
      _
    $region53: #{multi_head_attention.1} parent=1 // pred_fallthru
      _
    // Predicated region
    $region54: #{multi_head_attention.1} parent=1 // pred_check
      _
    $region55: #{multi_head_attention.1} parent=1 // pred_check_branch
      %1159 = sbr.rel (0) target = $region57
    $region56: #{multi_head_attention.1} parent=1 // pred_region
      %1161 = dma.done [#allocation3], 256
    $region57: #{multi_head_attention.1} parent=1 // pred_fallthru
      _
    // Predicated region
    $region58: #{multi_head_attention.1} parent=1 // pred_check
      _
    $region59: #{multi_head_attention.1} parent=1 // pred_check_branch
      %1163 = sbr.rel (0) target = $region61
    $region60: #{multi_head_attention.1} parent=1 // pred_region
      %1165 = dma.done [#allocation5], 256
    $region61: #{multi_head_attention.1} parent=1 // pred_fallthru
      _
    // Predicated region
    $region62: #{multi_head_attention.1} parent=1 // pred_check
      _
    $region63: #{multi_head_attention.1} parent=1 // pred_check_branch
      %1167 = sbr.rel (0) target = $region65
    $region64: #{multi_head_attention.1} parent=1 // pred_region
      _
    $region65: #{multi_head_attention.1} parent=1 // pred_fallthru
      _
    %1168 = vsyncpa [#allocation3], 1
    %1169 = vsyncpa [#allocation5], 1

</llo_original>
